<compile_context>
chip_gen: v7x
topology: tpu7x:2x2x1
jax: 0.10.0
libtpu: 0.0.40
codegen_flags: <defaults>
</compile_context>

<pallas_src>
from typing import NamedTuple, Optional

import numpy as np
import jax
import jax.numpy as jnp
from jax.experimental import pallas as pl
from jax.experimental.pallas import tpu as pltpu


class PackedSequence(NamedTuple):
    data: jax.Array            # [total, F]
    batch_sizes: jax.Array     # [max_len] int32
    sorted_indices: Optional[jax.Array]
    unsorted_indices: Optional[jax.Array]


_RING = 32          # DMA semaphore ring depth (power of two); keeps ~MBs in flight
_UNROLL_MAX = 8     # runs with <= this many per-timestep copies are fully unrolled


def _compute_runs(batch_sizes):
    """Maximal runs of equal batch size: [(n, t0, L, off0), ...], and total packed rows."""
    runs = []
    t, off = 0, 0
    max_len = len(batch_sizes)
    while t < max_len:
        n = batch_sizes[t]
        t1 = t
        while t1 < max_len and batch_sizes[t1] == n:
            t1 += 1
        L = t1 - t
        runs.append((n, t, L, off))
        off += n * L
        t = t1
    return runs, off


def _make_kernel(runs, ring, squeeze_views):
    """Kernel issuing HBM->HBM DMAs for every run; all sizes/offsets are trace-time ints."""

    def kernel(x_ref, out_ref, sems):
        # x_ref  : (B, T, F)                   raw HBM ref (memory_space=pl.ANY)
        # out_ref: (total, F) or (total, 1, F) raw HBM ref (memory_space=pl.ANY)
        # sems   : DMA semaphore ring, shape (ring,)
        for (n, t0, L, off0) in runs:
            if squeeze_views and n == 1:
                # Whole run collapses to a single contiguous -> contiguous burst.
                cp = pltpu.make_async_copy(
                    x_ref.at[0, pl.ds(t0, L), :],
                    out_ref.at[pl.ds(off0, L), :],
                    sems.at[0],
                )
                cp.start()
                cp.wait()
                continue

            def timestep_copy(i, n=n, t0=t0, off0=off0):
                # Copy rows 0..n-1 of timestep t0+i -> packed rows off0+i*n .. +n-1.
                t = t0 + i
                off = off0 + i * n
                if squeeze_views:
                    src = x_ref.at[0:n, t, :]                 # (n, F) strided source
                    dst = out_ref.at[pl.ds(off, n), :]        # (n, F) contiguous dest
                else:
                    src = x_ref.at[0:n, pl.ds(t, 1), :]       # (n, 1, F)
                    dst = out_ref.at[pl.ds(off, n)]           # (n, 1, F)
                return pltpu.make_async_copy(src, dst, sems.at[i % ring])

            if L <= _UNROLL_MAX:
                # Short run: unroll, start everything, then drain (L <= ring, no reuse).
                for i in range(L):
                    timestep_copy(i).start()
                for i in range(L):
                    timestep_copy(i).wait()
            else:
                n_prolog = min(L, ring)

                @pl.loop(0, n_prolog)
                def _(i):
                    timestep_copy(i).start()

                if L > ring:
                    @pl.loop(ring, L)
                    def _(i):
                        # Free the slot used `ring` copies ago, then reuse it.
                        timestep_copy(i - ring).wait()
                        timestep_copy(i).start()

                @pl.loop(max(0, L - ring), L)
                def _(i):
                    timestep_copy(i).wait()

    return kernel


def _build_packer(runs, total, B, T, F, dtype, squeeze_views):
    ring = _RING
    kernel = _make_kernel(tuple(runs), ring, squeeze_views)
    if squeeze_views:
        out_sds = jax.ShapeDtypeStruct((total, F), dtype)
    else:
        out_sds = jax.ShapeDtypeStruct((total, 1, F), dtype)

    pallas_fn = pl.pallas_call(
        kernel,
        out_shape=out_sds,
        in_specs=[pl.BlockSpec(memory_space=pl.ANY)],     # keep x in HBM, no auto-DMA
        out_specs=pl.BlockSpec(memory_space=pl.ANY),      # packed output lives in HBM
        scratch_shapes=[pltpu.SemaphoreType.DMA((ring,))],
        compiler_params=pltpu.CompilerParams(has_side_effects=True),
    )

    @jax.jit
    def packer(x):
        out = pallas_fn(x)
        if not squeeze_views:
            out = out.reshape(total, F)   # unit-dim drop; free under jit
        return out

    return packer


_PACKER_CACHE = {}


def _pack_padded_pallas(x3, runs, total, B, T, F):
    """x3: [B, T, F] batch-first (HBM). Returns packed data [total, F]."""
    key = (runs, total, B, T, F, str(x3.dtype))
    fn = _PACKER_CACHE.get(key)
    if fn is not None:
        return fn(x3)

    last_err = None
    for squeeze_views in (True, False):   # try coalesced variant first, then safe fallback
        fn = _build_packer(runs, total, B, T, F, x3.dtype, squeeze_views)
        try:
            out = fn(x3)
        except Exception as e:            # lowering/compile failure -> fall back
            last_err = e
            continue
        _PACKER_CACHE[key] = fn
        return out
    raise last_err


def sequence_packer(x, sizes):
    """Forward of SequencePacker.

    x     : [B, T, ...] padded, batch-first
    sizes : [B, K] int; sizes[:, 0] are sequence lengths, sorted descending
            (pack_padded_sequence default enforce_sorted=True).
    Returns (PackedSequence(data, batch_sizes, None, None), sizes).
    """
    if x.ndim < 2:
        raise ValueError("x must be at least [B, T]")
    B, T = int(x.shape[0]), int(x.shape[1])
    trailing = tuple(int(d) for d in x.shape[2:])
    F = 1
    for d in trailing:
        F *= d

    # pack_padded_sequence requires host (CPU) lengths, exactly like PyTorch.
    lengths_host = np.asarray(jax.device_get(sizes[:, 0])).astype(np.int64)
    if lengths_host.shape[0] != B:
        raise ValueError("sizes[:, 0] must have one length per batch row.")
    if np.any(np.diff(lengths_host) > 0):
        raise ValueError("lengths must be sorted in decreasing order (enforce_sorted=True).")
    if np.any(lengths_host <= 0) or np.any(lengths_host > T):
        raise ValueError("all sequence lengths must be in [1, T].")

    max_len = int(lengths_host.max())
    batch_sizes_np = (
        lengths_host[None, :] > np.arange(max_len, dtype=np.int64)[:, None]
    ).sum(axis=1).astype(np.int64)

    runs, total = _compute_runs([int(v) for v in batch_sizes_np])

    x3 = x if (len(trailing) == 1) else x.reshape(B, T, F)
    data = _pack_padded_pallas(x3, tuple(runs), total, B, T, F)
    if len(trailing) != 1:
        data = data.reshape((total,) + trailing)

    packed = PackedSequence(
        data=data,
        batch_sizes=jnp.asarray(batch_sizes_np, dtype=jnp.int32),  # torch uses int64
        sorted_indices=None,
        unsorted_indices=None,
    )
    return packed, sizes


def _reference_pack(x_np, lengths_np):
    """Pure-numpy reference of pack_padded_sequence(batch_first=True, enforce_sorted=True)."""
    max_len = int(lengths_np.max())
    data_rows, batch_sizes = [], []
    for t in range(max_len):
        n = int((lengths_np > t).sum())
        batch_sizes.append(n)
        data_rows.append(x_np[:n, t, :])
    return np.concatenate(data_rows, axis=0), np.asarray(batch_sizes, dtype=np.int32)


if __name__ == "__main__":
    key = jax.random.PRNGKey(0)
    B, T, F = 4, 48, 128

    x = jax.random.normal(key, (B, T, F), dtype=jnp.float32)

    # Lengths sorted descending (enforce_sorted=True). This pattern exercises every kernel
    # path: unrolled runs (n=4 L=2, n=3 L=4), the looped/ring path (n=2 L=38 > ring),
    # and the coalesced n==1 tail burst (L=4).
    lengths = jnp.array([48, 44, 6, 2], dtype=jnp.int32)
    sizes = jnp.stack([lengths, jnp.full((B,), 7, dtype=jnp.int32)], axis=1)  # [B, 2]

    packed, sizes_out = sequence_packer(x, sizes)
    jax.block_until_ready(packed.data)
    jax.block_until_ready(packed.batch_sizes)
    jax.block_until_ready(sizes_out)

    # Correctness vs. pure-numpy reference of pack_padded_sequence (exact copy -> exact match).
    ref_data, ref_bsz = _reference_pack(np.asarray(x), np.asarray(lengths))
    np.testing.assert_array_equal(np.asarray(packed.data), ref_data)
    np.testing.assert_array_equal(np.asarray(packed.batch_sizes), ref_bsz)
    np.testing.assert_array_equal(np.asarray(sizes_out), np.asarray(sizes))

    print("KERNEL_OK")
</pallas_src>

<mosaic_0001>
module attributes {stable_mosaic.version = 11 : i64} {
  func.func @kernel(%arg0: memref<4x48x128xf32, #tpu.memory_space<any>>, %arg1: memref<100x128xf32, #tpu.memory_space<any>>, %arg2: memref<32x!tpu.dma_semaphore, #tpu.memory_space<semaphore_mem>>) attributes {dimension_semantics = [], scalar_prefetch = 0 : i64, scratch_operands = 1 : i64, tpu.core_type = #tpu.core_type<tc>} {
    %c0_i32 = arith.constant 0 : i32
    %c0_i32_0 = arith.constant 0 : i32
    %c0_i32_1 = arith.constant 0 : i32
    %c0_i32_2 = arith.constant 0 : i32
    %0 = tpu.memref_slice %arg0[%c0_i32_1, %c0_i32, %c0_i32_2] : memref<4x48x128xf32, #tpu.memory_space<any>> -> memref<4x1x128xf32, #tpu.memory_space<any>>
    %1 = tpu.memref_squeeze %0 : memref<4x1x128xf32, #tpu.memory_space<any>> -> memref<4x128xf32, #tpu.memory_space<any>>
    %c0_i32_3 = arith.constant 0 : i32
    %c0_i32_4 = arith.constant 0 : i32
    %2 = tpu.memref_slice %arg1[%c0_i32_3, %c0_i32_4] : memref<100x128xf32, #tpu.memory_space<any>> -> memref<4x128xf32, #tpu.memory_space<any>>
    %3 = tpu.memref_slice %arg2[%c0_i32_0] : memref<32x!tpu.dma_semaphore, #tpu.memory_space<semaphore_mem>> -> memref<1x!tpu.dma_semaphore, #tpu.memory_space<semaphore_mem>>
    %4 = tpu.memref_squeeze %3 : memref<1x!tpu.dma_semaphore, #tpu.memory_space<semaphore_mem>> -> memref<!tpu.dma_semaphore, #tpu.memory_space<semaphore_mem>>
    tpu.enqueue_dma source(%1 : memref<4x128xf32, #tpu.memory_space<any>>) target(%2 : memref<4x128xf32, #tpu.memory_space<any>>) target_semaphore(%4 : memref<!tpu.dma_semaphore, #tpu.memory_space<semaphore_mem>>)
    %c1_i32 = arith.constant 1 : i32
    %c1_i32_5 = arith.constant 1 : i32
    %c0_i32_6 = arith.constant 0 : i32
    %c0_i32_7 = arith.constant 0 : i32
    %5 = tpu.memref_slice %arg0[%c0_i32_6, %c1_i32, %c0_i32_7] : memref<4x48x128xf32, #tpu.memory_space<any>> -> memref<4x1x128xf32, #tpu.memory_space<any>>
    %6 = tpu.memref_squeeze %5 : memref<4x1x128xf32, #tpu.memory_space<any>> -> memref<4x128xf32, #tpu.memory_space<any>>
    %c4_i32 = arith.constant 4 : i32
    %c0_i32_8 = arith.constant 0 : i32
    %7 = tpu.memref_slice %arg1[%c4_i32, %c0_i32_8] : memref<100x128xf32, #tpu.memory_space<any>> -> memref<4x128xf32, #tpu.memory_space<any>>
    %8 = tpu.memref_slice %arg2[%c1_i32_5] : memref<32x!tpu.dma_semaphore, #tpu.memory_space<semaphore_mem>> -> memref<1x!tpu.dma_semaphore, #tpu.memory_space<semaphore_mem>>
    %9 = tpu.memref_squeeze %8 : memref<1x!tpu.dma_semaphore, #tpu.memory_space<semaphore_mem>> -> memref<!tpu.dma_semaphore, #tpu.memory_space<semaphore_mem>>
    tpu.enqueue_dma source(%6 : memref<4x128xf32, #tpu.memory_space<any>>) target(%7 : memref<4x128xf32, #tpu.memory_space<any>>) target_semaphore(%9 : memref<!tpu.dma_semaphore, #tpu.memory_space<semaphore_mem>>)
    %c0_i32_9 = arith.constant 0 : i32
    %c0_i32_10 = arith.constant 0 : i32
    %c0_i32_11 = arith.constant 0 : i32
    %c0_i32_12 = arith.constant 0 : i32
    %10 = tpu.memref_slice %arg0[%c0_i32_11, %c0_i32_9, %c0_i32_12] : memref<4x48x128xf32, #tpu.memory_space<any>> -> memref<4x1x128xf32, #tpu.memory_space<any>>
    %11 = tpu.memref_squeeze %10 : memref<4x1x128xf32, #tpu.memory_space<any>> -> memref<4x128xf32, #tpu.memory_space<any>>
    %c0_i32_13 = arith.constant 0 : i32
    %c0_i32_14 = arith.constant 0 : i32
    %12 = tpu.memref_slice %arg1[%c0_i32_13, %c0_i32_14] : memref<100x128xf32, #tpu.memory_space<any>> -> memref<4x128xf32, #tpu.memory_space<any>>
    %13 = tpu.memref_slice %arg2[%c0_i32_10] : memref<32x!tpu.dma_semaphore, #tpu.memory_space<semaphore_mem>> -> memref<1x!tpu.dma_semaphore, #tpu.memory_space<semaphore_mem>>
    %14 = tpu.memref_squeeze %13 : memref<1x!tpu.dma_semaphore, #tpu.memory_space<semaphore_mem>> -> memref<!tpu.dma_semaphore, #tpu.memory_space<semaphore_mem>>
    tpu.wait_dma2 semaphore(%14 : memref<!tpu.dma_semaphore, #tpu.memory_space<semaphore_mem>>) src(%11 : memref<4x128xf32, #tpu.memory_space<any>>) dst(%12 : memref<4x128xf32, #tpu.memory_space<any>>)
    %c1_i32_15 = arith.constant 1 : i32
    %c1_i32_16 = arith.constant 1 : i32
    %c0_i32_17 = arith.constant 0 : i32
    %c0_i32_18 = arith.constant 0 : i32
    %15 = tpu.memref_slice %arg0[%c0_i32_17, %c1_i32_15, %c0_i32_18] : memref<4x48x128xf32, #tpu.memory_space<any>> -> memref<4x1x128xf32, #tpu.memory_space<any>>
    %16 = tpu.memref_squeeze %15 : memref<4x1x128xf32, #tpu.memory_space<any>> -> memref<4x128xf32, #tpu.memory_space<any>>
    %c4_i32_19 = arith.constant 4 : i32
    %c0_i32_20 = arith.constant 0 : i32
    %17 = tpu.memref_slice %arg1[%c4_i32_19, %c0_i32_20] : memref<100x128xf32, #tpu.memory_space<any>> -> memref<4x128xf32, #tpu.memory_space<any>>
    %18 = tpu.memref_slice %arg2[%c1_i32_16] : memref<32x!tpu.dma_semaphore, #tpu.memory_space<semaphore_mem>> -> memref<1x!tpu.dma_semaphore, #tpu.memory_space<semaphore_mem>>
    %19 = tpu.memref_squeeze %18 : memref<1x!tpu.dma_semaphore, #tpu.memory_space<semaphore_mem>> -> memref<!tpu.dma_semaphore, #tpu.memory_space<semaphore_mem>>
    tpu.wait_dma2 semaphore(%19 : memref<!tpu.dma_semaphore, #tpu.memory_space<semaphore_mem>>) src(%16 : memref<4x128xf32, #tpu.memory_space<any>>) dst(%17 : memref<4x128xf32, #tpu.memory_space<any>>)
    %c2_i32 = arith.constant 2 : i32
    %c0_i32_21 = arith.constant 0 : i32
    %c0_i32_22 = arith.constant 0 : i32
    %c0_i32_23 = arith.constant 0 : i32
    %20 = tpu.memref_slice %arg0[%c0_i32_22, %c2_i32, %c0_i32_23] : memref<4x48x128xf32, #tpu.memory_space<any>> -> memref<3x1x128xf32, #tpu.memory_space<any>>
    %21 = tpu.memref_squeeze %20 : memref<3x1x128xf32, #tpu.memory_space<any>> -> memref<3x128xf32, #tpu.memory_space<any>>
    %c8_i32 = arith.constant 8 : i32
    %c0_i32_24 = arith.constant 0 : i32
    %22 = tpu.memref_slice %arg1[%c8_i32, %c0_i32_24] : memref<100x128xf32, #tpu.memory_space<any>> -> memref<3x128xf32, #tpu.memory_space<any>>
    %23 = tpu.memref_slice %arg2[%c0_i32_21] : memref<32x!tpu.dma_semaphore, #tpu.memory_space<semaphore_mem>> -> memref<1x!tpu.dma_semaphore, #tpu.memory_space<semaphore_mem>>
    %24 = tpu.memref_squeeze %23 : memref<1x!tpu.dma_semaphore, #tpu.memory_space<semaphore_mem>> -> memref<!tpu.dma_semaphore, #tpu.memory_space<semaphore_mem>>
    tpu.enqueue_dma source(%21 : memref<3x128xf32, #tpu.memory_space<any>>) target(%22 : memref<3x128xf32, #tpu.memory_space<any>>) target_semaphore(%24 : memref<!tpu.dma_semaphore, #tpu.memory_space<semaphore_mem>>)
    %c3_i32 = arith.constant 3 : i32
    %c1_i32_25 = arith.constant 1 : i32
    %c0_i32_26 = arith.constant 0 : i32
    %c0_i32_27 = arith.constant 0 : i32
    %25 = tpu.memref_slice %arg0[%c0_i32_26, %c3_i32, %c0_i32_27] : memref<4x48x128xf32, #tpu.memory_space<any>> -> memref<3x1x128xf32, #tpu.memory_space<any>>
    %26 = tpu.memref_squeeze %25 : memref<3x1x128xf32, #tpu.memory_space<any>> -> memref<3x128xf32, #tpu.memory_space<any>>
    %c11_i32 = arith.constant 11 : i32
    %c0_i32_28 = arith.constant 0 : i32
    %27 = tpu.memref_slice %arg1[%c11_i32, %c0_i32_28] : memref<100x128xf32, #tpu.memory_space<any>> -> memref<3x128xf32, #tpu.memory_space<any>>
    %28 = tpu.memref_slice %arg2[%c1_i32_25] : memref<32x!tpu.dma_semaphore, #tpu.memory_space<semaphore_mem>> -> memref<1x!tpu.dma_semaphore, #tpu.memory_space<semaphore_mem>>
    %29 = tpu.memref_squeeze %28 : memref<1x!tpu.dma_semaphore, #tpu.memory_space<semaphore_mem>> -> memref<!tpu.dma_semaphore, #tpu.memory_space<semaphore_mem>>
    tpu.enqueue_dma source(%26 : memref<3x128xf32, #tpu.memory_space<any>>) target(%27 : memref<3x128xf32, #tpu.memory_space<any>>) target_semaphore(%29 : memref<!tpu.dma_semaphore, #tpu.memory_space<semaphore_mem>>)
    %c4_i32_29 = arith.constant 4 : i32
    %c2_i32_30 = arith.constant 2 : i32
    %c0_i32_31 = arith.constant 0 : i32
    %c0_i32_32 = arith.constant 0 : i32
    %30 = tpu.memref_slice %arg0[%c0_i32_31, %c4_i32_29, %c0_i32_32] : memref<4x48x128xf32, #tpu.memory_space<any>> -> memref<3x1x128xf32, #tpu.memory_space<any>>
    %31 = tpu.memref_squeeze %30 : memref<3x1x128xf32, #tpu.memory_space<any>> -> memref<3x128xf32, #tpu.memory_space<any>>
    %c14_i32 = arith.constant 14 : i32
    %c0_i32_33 = arith.constant 0 : i32
    %32 = tpu.memref_slice %arg1[%c14_i32, %c0_i32_33] : memref<100x128xf32, #tpu.memory_space<any>> -> memref<3x128xf32, #tpu.memory_space<any>>
    %33 = tpu.memref_slice %arg2[%c2_i32_30] : memref<32x!tpu.dma_semaphore, #tpu.memory_space<semaphore_mem>> -> memref<1x!tpu.dma_semaphore, #tpu.memory_space<semaphore_mem>>
    %34 = tpu.memref_squeeze %33 : memref<1x!tpu.dma_semaphore, #tpu.memory_space<semaphore_mem>> -> memref<!tpu.dma_semaphore, #tpu.memory_space<semaphore_mem>>
    tpu.enqueue_dma source(%31 : memref<3x128xf32, #tpu.memory_space<any>>) target(%32 : memref<3x128xf32, #tpu.memory_space<any>>) target_semaphore(%34 : memref<!tpu.dma_semaphore, #tpu.memory_space<semaphore_mem>>)
    %c5_i32 = arith.constant 5 : i32
    %c3_i32_34 = arith.constant 3 : i32
    %c0_i32_35 = arith.constant 0 : i32
    %c0_i32_36 = arith.constant 0 : i32
    %35 = tpu.memref_slice %arg0[%c0_i32_35, %c5_i32, %c0_i32_36] : memref<4x48x128xf32, #tpu.memory_space<any>> -> memref<3x1x128xf32, #tpu.memory_space<any>>
    %36 = tpu.memref_squeeze %35 : memref<3x1x128xf32, #tpu.memory_space<any>> -> memref<3x128xf32, #tpu.memory_space<any>>
    %c17_i32 = arith.constant 17 : i32
    %c0_i32_37 = arith.constant 0 : i32
    %37 = tpu.memref_slice %arg1[%c17_i32, %c0_i32_37] : memref<100x128xf32, #tpu.memory_space<any>> -> memref<3x128xf32, #tpu.memory_space<any>>
    %38 = tpu.memref_slice %arg2[%c3_i32_34] : memref<32x!tpu.dma_semaphore, #tpu.memory_space<semaphore_mem>> -> memref<1x!tpu.dma_semaphore, #tpu.memory_space<semaphore_mem>>
    %39 = tpu.memref_squeeze %38 : memref<1x!tpu.dma_semaphore, #tpu.memory_space<semaphore_mem>> -> memref<!tpu.dma_semaphore, #tpu.memory_space<semaphore_mem>>
    tpu.enqueue_dma source(%36 : memref<3x128xf32, #tpu.memory_space<any>>) target(%37 : memref<3x128xf32, #tpu.memory_space<any>>) target_semaphore(%39 : memref<!tpu.dma_semaphore, #tpu.memory_space<semaphore_mem>>)
    %c2_i32_38 = arith.constant 2 : i32
    %c0_i32_39 = arith.constant 0 : i32
    %c0_i32_40 = arith.constant 0 : i32
    %c0_i32_41 = arith.constant 0 : i32
    %40 = tpu.memref_slice %arg0[%c0_i32_40, %c2_i32_38, %c0_i32_41] : memref<4x48x128xf32, #tpu.memory_space<any>> -> memref<3x1x128xf32, #tpu.memory_space<any>>
    %41 = tpu.memref_squeeze %40 : memref<3x1x128xf32, #tpu.memory_space<any>> -> memref<3x128xf32, #tpu.memory_space<any>>
    %c8_i32_42 = arith.constant 8 : i32
    %c0_i32_43 = arith.constant 0 : i32
    %42 = tpu.memref_slice %arg1[%c8_i32_42, %c0_i32_43] : memref<100x128xf32, #tpu.memory_space<any>> -> memref<3x128xf32, #tpu.memory_space<any>>
    %43 = tpu.memref_slice %arg2[%c0_i32_39] : memref<32x!tpu.dma_semaphore, #tpu.memory_space<semaphore_mem>> -> memref<1x!tpu.dma_semaphore, #tpu.memory_space<semaphore_mem>>
    %44 = tpu.memref_squeeze %43 : memref<1x!tpu.dma_semaphore, #tpu.memory_space<semaphore_mem>> -> memref<!tpu.dma_semaphore, #tpu.memory_space<semaphore_mem>>
    tpu.wait_dma2 semaphore(%44 : memref<!tpu.dma_semaphore, #tpu.memory_space<semaphore_mem>>) src(%41 : memref<3x128xf32, #tpu.memory_space<any>>) dst(%42 : memref<3x128xf32, #tpu.memory_space<any>>)
    %c3_i32_44 = arith.constant 3 : i32
    %c1_i32_45 = arith.constant 1 : i32
    %c0_i32_46 = arith.constant 0 : i32
    %c0_i32_47 = arith.constant 0 : i32
    %45 = tpu.memref_slice %arg0[%c0_i32_46, %c3_i32_44, %c0_i32_47] : memref<4x48x128xf32, #tpu.memory_space<any>> -> memref<3x1x128xf32, #tpu.memory_space<any>>
    %46 = tpu.memref_squeeze %45 : memref<3x1x128xf32, #tpu.memory_space<any>> -> memref<3x128xf32, #tpu.memory_space<any>>
    %c11_i32_48 = arith.constant 11 : i32
    %c0_i32_49 = arith.constant 0 : i32
    %47 = tpu.memref_slice %arg1[%c11_i32_48, %c0_i32_49] : memref<100x128xf32, #tpu.memory_space<any>> -> memref<3x128xf32, #tpu.memory_space<any>>
    %48 = tpu.memref_slice %arg2[%c1_i32_45] : memref<32x!tpu.dma_semaphore, #tpu.memory_space<semaphore_mem>> -> memref<1x!tpu.dma_semaphore, #tpu.memory_space<semaphore_mem>>
    %49 = tpu.memref_squeeze %48 : memref<1x!tpu.dma_semaphore, #tpu.memory_space<semaphore_mem>> -> memref<!tpu.dma_semaphore, #tpu.memory_space<semaphore_mem>>
    tpu.wait_dma2 semaphore(%49 : memref<!tpu.dma_semaphore, #tpu.memory_space<semaphore_mem>>) src(%46 : memref<3x128xf32, #tpu.memory_space<any>>) dst(%47 : memref<3x128xf32, #tpu.memory_space<any>>)
    %c4_i32_50 = arith.constant 4 : i32
    %c2_i32_51 = arith.constant 2 : i32
    %c0_i32_52 = arith.constant 0 : i32
    %c0_i32_53 = arith.constant 0 : i32
    %50 = tpu.memref_slice %arg0[%c0_i32_52, %c4_i32_50, %c0_i32_53] : memref<4x48x128xf32, #tpu.memory_space<any>> -> memref<3x1x128xf32, #tpu.memory_space<any>>
    %51 = tpu.memref_squeeze %50 : memref<3x1x128xf32, #tpu.memory_space<any>> -> memref<3x128xf32, #tpu.memory_space<any>>
    %c14_i32_54 = arith.constant 14 : i32
    %c0_i32_55 = arith.constant 0 : i32
    %52 = tpu.memref_slice %arg1[%c14_i32_54, %c0_i32_55] : memref<100x128xf32, #tpu.memory_space<any>> -> memref<3x128xf32, #tpu.memory_space<any>>
    %53 = tpu.memref_slice %arg2[%c2_i32_51] : memref<32x!tpu.dma_semaphore, #tpu.memory_space<semaphore_mem>> -> memref<1x!tpu.dma_semaphore, #tpu.memory_space<semaphore_mem>>
    %54 = tpu.memref_squeeze %53 : memref<1x!tpu.dma_semaphore, #tpu.memory_space<semaphore_mem>> -> memref<!tpu.dma_semaphore, #tpu.memory_space<semaphore_mem>>
    tpu.wait_dma2 semaphore(%54 : memref<!tpu.dma_semaphore, #tpu.memory_space<semaphore_mem>>) src(%51 : memref<3x128xf32, #tpu.memory_space<any>>) dst(%52 : memref<3x128xf32, #tpu.memory_space<any>>)
    %c5_i32_56 = arith.constant 5 : i32
    %c3_i32_57 = arith.constant 3 : i32
    %c0_i32_58 = arith.constant 0 : i32
    %c0_i32_59 = arith.constant 0 : i32
    %55 = tpu.memref_slice %arg0[%c0_i32_58, %c5_i32_56, %c0_i32_59] : memref<4x48x128xf32, #tpu.memory_space<any>> -> memref<3x1x128xf32, #tpu.memory_space<any>>
    %56 = tpu.memref_squeeze %55 : memref<3x1x128xf32, #tpu.memory_space<any>> -> memref<3x128xf32, #tpu.memory_space<any>>
    %c17_i32_60 = arith.constant 17 : i32
    %c0_i32_61 = arith.constant 0 : i32
    %57 = tpu.memref_slice %arg1[%c17_i32_60, %c0_i32_61] : memref<100x128xf32, #tpu.memory_space<any>> -> memref<3x128xf32, #tpu.memory_space<any>>
    %58 = tpu.memref_slice %arg2[%c3_i32_57] : memref<32x!tpu.dma_semaphore, #tpu.memory_space<semaphore_mem>> -> memref<1x!tpu.dma_semaphore, #tpu.memory_space<semaphore_mem>>
    %59 = tpu.memref_squeeze %58 : memref<1x!tpu.dma_semaphore, #tpu.memory_space<semaphore_mem>> -> memref<!tpu.dma_semaphore, #tpu.memory_space<semaphore_mem>>
    tpu.wait_dma2 semaphore(%59 : memref<!tpu.dma_semaphore, #tpu.memory_space<semaphore_mem>>) src(%56 : memref<3x128xf32, #tpu.memory_space<any>>) dst(%57 : memref<3x128xf32, #tpu.memory_space<any>>)
    %c0_i32_62 = arith.constant 0 : i32
    %c32_i32 = arith.constant 32 : i32
    %60 = arith.addi %c0_i32_62, %c32_i32 : i32
    %c1_i32_63 = arith.constant 1 : i32
    scf.for %arg3 = %c0_i32_62 to %60 step %c1_i32_63  : i32 {
      %c1_i32_82 = arith.constant 1 : i32
      %73 = arith.muli %arg3, %c1_i32_82 : i32
      %c0_i32_83 = arith.constant 0 : i32
      %74 = arith.addi %c0_i32_83, %73 : i32
      %c6_i32_84 = arith.constant 6 : i32
      %75 = arith.addi %c6_i32_84, %74 : i32
      %c2_i32_85 = arith.constant 2 : i32
      %76 = arith.muli %74, %c2_i32_85 : i32
      %c20_i32 = arith.constant 20 : i32
      %77 = arith.addi %c20_i32, %76 : i32
      %c32_i32_86 = arith.constant 32 : i32
      %c0_i32_87 = arith.constant 0 : i32
      %78 = arith.cmpi eq, %c32_i32_86, %c0_i32_87 : i32
      %c1_i32_88 = arith.constant 1 : i32
      %79 = arith.select %78, %c1_i32_88, %c32_i32_86 : i32
      %80 = arith.remsi %74, %79 : i32
      %c0_i32_89 = arith.constant 0 : i32
      %81 = arith.cmpi ne, %80, %c0_i32_89 : i32
      %c0_i32_90 = arith.constant 0 : i32
      %82 = arith.cmpi slt, %80, %c0_i32_90 : i32
      %c0_i32_91 = arith.constant 0 : i32
      %83 = arith.cmpi slt, %79, %c0_i32_91 : i32
      %84 = arith.xori %82, %83 : i1
      %85 = arith.andi %84, %81 : i1
      %86 = arith.addi %80, %79 : i32
      %87 = arith.select %85, %86, %80 : i32
      %c0_i32_92 = arith.constant 0 : i32
      %c0_i32_93 = arith.constant 0 : i32
      %88 = tpu.memref_slice %arg0[%c0_i32_92, %75, %c0_i32_93] : memref<4x48x128xf32, #tpu.memory_space<any>> -> memref<2x1x128xf32, #tpu.memory_space<any>>
      %89 = tpu.memref_squeeze %88 : memref<2x1x128xf32, #tpu.memory_space<any>> -> memref<2x128xf32, #tpu.memory_space<any>>
      %c0_i32_94 = arith.constant 0 : i32
      %90 = tpu.memref_slice %arg1[%77, %c0_i32_94] : memref<100x128xf32, #tpu.memory_space<any>> -> memref<2x128xf32, #tpu.memory_space<any>>
      %91 = tpu.memref_slice %arg2[%87] : memref<32x!tpu.dma_semaphore, #tpu.memory_space<semaphore_mem>> -> memref<1x!tpu.dma_semaphore, #tpu.memory_space<semaphore_mem>>
      %92 = tpu.memref_squeeze %91 : memref<1x!tpu.dma_semaphore, #tpu.memory_space<semaphore_mem>> -> memref<!tpu.dma_semaphore, #tpu.memory_space<semaphore_mem>>
      tpu.enqueue_dma source(%89 : memref<2x128xf32, #tpu.memory_space<any>>) target(%90 : memref<2x128xf32, #tpu.memory_space<any>>) target_semaphore(%92 : memref<!tpu.dma_semaphore, #tpu.memory_space<semaphore_mem>>)
    }
    %c32_i32_64 = arith.constant 32 : i32
    %c0_i32_65 = arith.constant 0 : i32
    %c6_i32 = arith.constant 6 : i32
    %61 = arith.addi %c0_i32_65, %c6_i32 : i32
    %c1_i32_66 = arith.constant 1 : i32
    scf.for %arg3 = %c0_i32_65 to %61 step %c1_i32_66  : i32 {
      %c1_i32_82 = arith.constant 1 : i32
      %73 = arith.muli %arg3, %c1_i32_82 : i32
      %c32_i32_83 = arith.constant 32 : i32
      %74 = arith.addi %c32_i32_83, %73 : i32
      %c32_i32_84 = arith.constant 32 : i32
      %75 = arith.subi %74, %c32_i32_84 : i32
      %c6_i32_85 = arith.constant 6 : i32
      %76 = arith.addi %c6_i32_85, %75 : i32
      %c2_i32_86 = arith.constant 2 : i32
      %77 = arith.muli %75, %c2_i32_86 : i32
      %c20_i32 = arith.constant 20 : i32
      %78 = arith.addi %c20_i32, %77 : i32
      %c32_i32_87 = arith.constant 32 : i32
      %c0_i32_88 = arith.constant 0 : i32
      %79 = arith.cmpi eq, %c32_i32_87, %c0_i32_88 : i32
      %c1_i32_89 = arith.constant 1 : i32
      %80 = arith.select %79, %c1_i32_89, %c32_i32_87 : i32
      %81 = arith.remsi %75, %80 : i32
      %c0_i32_90 = arith.constant 0 : i32
      %82 = arith.cmpi ne, %81, %c0_i32_90 : i32
      %c0_i32_91 = arith.constant 0 : i32
      %83 = arith.cmpi slt, %81, %c0_i32_91 : i32
      %c0_i32_92 = arith.constant 0 : i32
      %84 = arith.cmpi slt, %80, %c0_i32_92 : i32
      %85 = arith.xori %83, %84 : i1
      %86 = arith.andi %85, %82 : i1
      %87 = arith.addi %81, %80 : i32
      %88 = arith.select %86, %87, %81 : i32
      %c0_i32_93 = arith.constant 0 : i32
      %c0_i32_94 = arith.constant 0 : i32
      %89 = tpu.memref_slice %arg0[%c0_i32_93, %76, %c0_i32_94] : memref<4x48x128xf32, #tpu.memory_space<any>> -> memref<2x1x128xf32, #tpu.memory_space<any>>
      %90 = tpu.memref_squeeze %89 : memref<2x1x128xf32, #tpu.memory_space<any>> -> memref<2x128xf32, #tpu.memory_space<any>>
      %c0_i32_95 = arith.constant 0 : i32
      %91 = tpu.memref_slice %arg1[%78, %c0_i32_95] : memref<100x128xf32, #tpu.memory_space<any>> -> memref<2x128xf32, #tpu.memory_space<any>>
      %92 = tpu.memref_slice %arg2[%88] : memref<32x!tpu.dma_semaphore, #tpu.memory_space<semaphore_mem>> -> memref<1x!tpu.dma_semaphore, #tpu.memory_space<semaphore_mem>>
      %93 = tpu.memref_squeeze %92 : memref<1x!tpu.dma_semaphore, #tpu.memory_space<semaphore_mem>> -> memref<!tpu.dma_semaphore, #tpu.memory_space<semaphore_mem>>
      tpu.wait_dma2 semaphore(%93 : memref<!tpu.dma_semaphore, #tpu.memory_space<semaphore_mem>>) src(%90 : memref<2x128xf32, #tpu.memory_space<any>>) dst(%91 : memref<2x128xf32, #tpu.memory_space<any>>)
      %c6_i32_96 = arith.constant 6 : i32
      %94 = arith.addi %c6_i32_96, %74 : i32
      %c2_i32_97 = arith.constant 2 : i32
      %95 = arith.muli %74, %c2_i32_97 : i32
      %c20_i32_98 = arith.constant 20 : i32
      %96 = arith.addi %c20_i32_98, %95 : i32
      %c32_i32_99 = arith.constant 32 : i32
      %c0_i32_100 = arith.constant 0 : i32
      %97 = arith.cmpi eq, %c32_i32_99, %c0_i32_100 : i32
      %c1_i32_101 = arith.constant 1 : i32
      %98 = arith.select %97, %c1_i32_101, %c32_i32_99 : i32
      %99 = arith.remsi %74, %98 : i32
      %c0_i32_102 = arith.constant 0 : i32
      %100 = arith.cmpi ne, %99, %c0_i32_102 : i32
      %c0_i32_103 = arith.constant 0 : i32
      %101 = arith.cmpi slt, %99, %c0_i32_103 : i32
      %c0_i32_104 = arith.constant 0 : i32
      %102 = arith.cmpi slt, %98, %c0_i32_104 : i32
      %103 = arith.xori %101, %102 : i1
      %104 = arith.andi %103, %100 : i1
      %105 = arith.addi %99, %98 : i32
      %106 = arith.select %104, %105, %99 : i32
      %c0_i32_105 = arith.constant 0 : i32
      %c0_i32_106 = arith.constant 0 : i32
      %107 = tpu.memref_slice %arg0[%c0_i32_105, %94, %c0_i32_106] : memref<4x48x128xf32, #tpu.memory_space<any>> -> memref<2x1x128xf32, #tpu.memory_space<any>>
      %108 = tpu.memref_squeeze %107 : memref<2x1x128xf32, #tpu.memory_space<any>> -> memref<2x128xf32, #tpu.memory_space<any>>
      %c0_i32_107 = arith.constant 0 : i32
      %109 = tpu.memref_slice %arg1[%96, %c0_i32_107] : memref<100x128xf32, #tpu.memory_space<any>> -> memref<2x128xf32, #tpu.memory_space<any>>
      %110 = tpu.memref_slice %arg2[%106] : memref<32x!tpu.dma_semaphore, #tpu.memory_space<semaphore_mem>> -> memref<1x!tpu.dma_semaphore, #tpu.memory_space<semaphore_mem>>
      %111 = tpu.memref_squeeze %110 : memref<1x!tpu.dma_semaphore, #tpu.memory_space<semaphore_mem>> -> memref<!tpu.dma_semaphore, #tpu.memory_space<semaphore_mem>>
      tpu.enqueue_dma source(%108 : memref<2x128xf32, #tpu.memory_space<any>>) target(%109 : memref<2x128xf32, #tpu.memory_space<any>>) target_semaphore(%111 : memref<!tpu.dma_semaphore, #tpu.memory_space<semaphore_mem>>)
    }
    %c6_i32_67 = arith.constant 6 : i32
    %c0_i32_68 = arith.constant 0 : i32
    %c32_i32_69 = arith.constant 32 : i32
    %62 = arith.addi %c0_i32_68, %c32_i32_69 : i32
    %c1_i32_70 = arith.constant 1 : i32
    scf.for %arg3 = %c0_i32_68 to %62 step %c1_i32_70  : i32 {
      %c1_i32_82 = arith.constant 1 : i32
      %73 = arith.muli %arg3, %c1_i32_82 : i32
      %c6_i32_83 = arith.constant 6 : i32
      %74 = arith.addi %c6_i32_83, %73 : i32
      %c6_i32_84 = arith.constant 6 : i32
      %75 = arith.addi %c6_i32_84, %74 : i32
      %c2_i32_85 = arith.constant 2 : i32
      %76 = arith.muli %74, %c2_i32_85 : i32
      %c20_i32 = arith.constant 20 : i32
      %77 = arith.addi %c20_i32, %76 : i32
      %c32_i32_86 = arith.constant 32 : i32
      %c0_i32_87 = arith.constant 0 : i32
      %78 = arith.cmpi eq, %c32_i32_86, %c0_i32_87 : i32
      %c1_i32_88 = arith.constant 1 : i32
      %79 = arith.select %78, %c1_i32_88, %c32_i32_86 : i32
      %80 = arith.remsi %74, %79 : i32
      %c0_i32_89 = arith.constant 0 : i32
      %81 = arith.cmpi ne, %80, %c0_i32_89 : i32
      %c0_i32_90 = arith.constant 0 : i32
      %82 = arith.cmpi slt, %80, %c0_i32_90 : i32
      %c0_i32_91 = arith.constant 0 : i32
      %83 = arith.cmpi slt, %79, %c0_i32_91 : i32
      %84 = arith.xori %82, %83 : i1
      %85 = arith.andi %84, %81 : i1
      %86 = arith.addi %80, %79 : i32
      %87 = arith.select %85, %86, %80 : i32
      %c0_i32_92 = arith.constant 0 : i32
      %c0_i32_93 = arith.constant 0 : i32
      %88 = tpu.memref_slice %arg0[%c0_i32_92, %75, %c0_i32_93] : memref<4x48x128xf32, #tpu.memory_space<any>> -> memref<2x1x128xf32, #tpu.memory_space<any>>
      %89 = tpu.memref_squeeze %88 : memref<2x1x128xf32, #tpu.memory_space<any>> -> memref<2x128xf32, #tpu.memory_space<any>>
      %c0_i32_94 = arith.constant 0 : i32
      %90 = tpu.memref_slice %arg1[%77, %c0_i32_94] : memref<100x128xf32, #tpu.memory_space<any>> -> memref<2x128xf32, #tpu.memory_space<any>>
      %91 = tpu.memref_slice %arg2[%87] : memref<32x!tpu.dma_semaphore, #tpu.memory_space<semaphore_mem>> -> memref<1x!tpu.dma_semaphore, #tpu.memory_space<semaphore_mem>>
      %92 = tpu.memref_squeeze %91 : memref<1x!tpu.dma_semaphore, #tpu.memory_space<semaphore_mem>> -> memref<!tpu.dma_semaphore, #tpu.memory_space<semaphore_mem>>
      tpu.wait_dma2 semaphore(%92 : memref<!tpu.dma_semaphore, #tpu.memory_space<semaphore_mem>>) src(%89 : memref<2x128xf32, #tpu.memory_space<any>>) dst(%90 : memref<2x128xf32, #tpu.memory_space<any>>)
    }
    %c32_i32_71 = arith.constant 32 : i32
    %c0_i32_72 = arith.constant 0 : i32
    %c0_i32_73 = arith.constant 0 : i32
    %c44_i32 = arith.constant 44 : i32
    %c0_i32_74 = arith.constant 0 : i32
    %63 = tpu.memref_slice %arg0[%c0_i32_72, %c44_i32, %c0_i32_74] : memref<4x48x128xf32, #tpu.memory_space<any>> -> memref<1x4x128xf32, #tpu.memory_space<any>>
    %64 = tpu.memref_squeeze %63 : memref<1x4x128xf32, #tpu.memory_space<any>> -> memref<4x128xf32, #tpu.memory_space<any>>
    %c96_i32 = arith.constant 96 : i32
    %c0_i32_75 = arith.constant 0 : i32
    %65 = tpu.memref_slice %arg1[%c96_i32, %c0_i32_75] : memref<100x128xf32, #tpu.memory_space<any>> -> memref<4x128xf32, #tpu.memory_space<any>>
    %66 = tpu.memref_slice %arg2[%c0_i32_73] : memref<32x!tpu.dma_semaphore, #tpu.memory_space<semaphore_mem>> -> memref<1x!tpu.dma_semaphore, #tpu.memory_space<semaphore_mem>>
    %67 = tpu.memref_squeeze %66 : memref<1x!tpu.dma_semaphore, #tpu.memory_space<semaphore_mem>> -> memref<!tpu.dma_semaphore, #tpu.memory_space<semaphore_mem>>
    tpu.enqueue_dma source(%64 : memref<4x128xf32, #tpu.memory_space<any>>) target(%65 : memref<4x128xf32, #tpu.memory_space<any>>) target_semaphore(%67 : memref<!tpu.dma_semaphore, #tpu.memory_space<semaphore_mem>>)
    %c0_i32_76 = arith.constant 0 : i32
    %c0_i32_77 = arith.constant 0 : i32
    %c44_i32_78 = arith.constant 44 : i32
    %c0_i32_79 = arith.constant 0 : i32
    %68 = tpu.memref_slice %arg0[%c0_i32_76, %c44_i32_78, %c0_i32_79] : memref<4x48x128xf32, #tpu.memory_space<any>> -> memref<1x4x128xf32, #tpu.memory_space<any>>
    %69 = tpu.memref_squeeze %68 : memref<1x4x128xf32, #tpu.memory_space<any>> -> memref<4x128xf32, #tpu.memory_space<any>>
    %c96_i32_80 = arith.constant 96 : i32
    %c0_i32_81 = arith.constant 0 : i32
    %70 = tpu.memref_slice %arg1[%c96_i32_80, %c0_i32_81] : memref<100x128xf32, #tpu.memory_space<any>> -> memref<4x128xf32, #tpu.memory_space<any>>
    %71 = tpu.memref_slice %arg2[%c0_i32_77] : memref<32x!tpu.dma_semaphore, #tpu.memory_space<semaphore_mem>> -> memref<1x!tpu.dma_semaphore, #tpu.memory_space<semaphore_mem>>
    %72 = tpu.memref_squeeze %71 : memref<1x!tpu.dma_semaphore, #tpu.memory_space<semaphore_mem>> -> memref<!tpu.dma_semaphore, #tpu.memory_space<semaphore_mem>>
    tpu.wait_dma2 semaphore(%72 : memref<!tpu.dma_semaphore, #tpu.memory_space<semaphore_mem>>) src(%69 : memref<4x128xf32, #tpu.memory_space<any>>) dst(%70 : memref<4x128xf32, #tpu.memory_space<any>>)
    return
  }
}

module attributes {stable_mosaic.version = 11 : i64} {
  func.func @kernel(%arg0: memref<4x48x128xf32, #tpu.memory_space<any>>, %arg1: memref<100x1x128xf32, #tpu.memory_space<any>>, %arg2: memref<32x!tpu.dma_semaphore, #tpu.memory_space<semaphore_mem>>) attributes {dimension_semantics = [], scalar_prefetch = 0 : i64, scratch_operands = 1 : i64, tpu.core_type = #tpu.core_type<tc>} {
    %c0_i32 = arith.constant 0 : i32
    %c0_i32_0 = arith.constant 0 : i32
    %c0_i32_1 = arith.constant 0 : i32
    %c0_i32_2 = arith.constant 0 : i32
    %0 = tpu.memref_slice %arg0[%c0_i32_0, %c0_i32_1, %c0_i32_2] : memref<4x48x128xf32, #tpu.memory_space<any>> -> memref<4x1x128xf32, #tpu.memory_space<any>>
    %c0_i32_3 = arith.constant 0 : i32
    %c0_i32_4 = arith.constant 0 : i32
    %c0_i32_5 = arith.constant 0 : i32
    %1 = tpu.memref_slice %arg1[%c0_i32_3, %c0_i32_4, %c0_i32_5] : memref<100x1x128xf32, #tpu.memory_space<any>> -> memref<4x1x128xf32, #tpu.memory_space<any>>
    %2 = tpu.memref_slice %arg2[%c0_i32] : memref<32x!tpu.dma_semaphore, #tpu.memory_space<semaphore_mem>> -> memref<1x!tpu.dma_semaphore, #tpu.memory_space<semaphore_mem>>
    %3 = tpu.memref_squeeze %2 : memref<1x!tpu.dma_semaphore, #tpu.memory_space<semaphore_mem>> -> memref<!tpu.dma_semaphore, #tpu.memory_space<semaphore_mem>>
    tpu.enqueue_dma source(%0 : memref<4x1x128xf32, #tpu.memory_space<any>>) target(%1 : memref<4x1x128xf32, #tpu.memory_space<any>>) target_semaphore(%3 : memref<!tpu.dma_semaphore, #tpu.memory_space<semaphore_mem>>)
    %c1_i32 = arith.constant 1 : i32
    %c0_i32_6 = arith.constant 0 : i32
    %c1_i32_7 = arith.constant 1 : i32
    %c0_i32_8 = arith.constant 0 : i32
    %4 = tpu.memref_slice %arg0[%c0_i32_6, %c1_i32_7, %c0_i32_8] : memref<4x48x128xf32, #tpu.memory_space<any>> -> memref<4x1x128xf32, #tpu.memory_space<any>>
    %c4_i32 = arith.constant 4 : i32
    %c0_i32_9 = arith.constant 0 : i32
    %c0_i32_10 = arith.constant 0 : i32
    %5 = tpu.memref_slice %arg1[%c4_i32, %c0_i32_9, %c0_i32_10] : memref<100x1x128xf32, #tpu.memory_space<any>> -> memref<4x1x128xf32, #tpu.memory_space<any>>
    %6 = tpu.memref_slice %arg2[%c1_i32] : memref<32x!tpu.dma_semaphore, #tpu.memory_space<semaphore_mem>> -> memref<1x!tpu.dma_semaphore, #tpu.memory_space<semaphore_mem>>
    %7 = tpu.memref_squeeze %6 : memref<1x!tpu.dma_semaphore, #tpu.memory_space<semaphore_mem>> -> memref<!tpu.dma_semaphore, #tpu.memory_space<semaphore_mem>>
    tpu.enqueue_dma source(%4 : memref<4x1x128xf32, #tpu.memory_space<any>>) target(%5 : memref<4x1x128xf32, #tpu.memory_space<any>>) target_semaphore(%7 : memref<!tpu.dma_semaphore, #tpu.memory_space<semaphore_mem>>)
    %c0_i32_11 = arith.constant 0 : i32
    %c0_i32_12 = arith.constant 0 : i32
    %c0_i32_13 = arith.constant 0 : i32
    %c0_i32_14 = arith.constant 0 : i32
    %8 = tpu.memref_slice %arg0[%c0_i32_12, %c0_i32_13, %c0_i32_14] : memref<4x48x128xf32, #tpu.memory_space<any>> -> memref<4x1x128xf32, #tpu.memory_space<any>>
    %c0_i32_15 = arith.constant 0 : i32
    %c0_i32_16 = arith.constant 0 : i32
    %c0_i32_17 = arith.constant 0 : i32
    %9 = tpu.memref_slice %arg1[%c0_i32_15, %c0_i32_16, %c0_i32_17] : memref<100x1x128xf32, #tpu.memory_space<any>> -> memref<4x1x128xf32, #tpu.memory_space<any>>
    %10 = tpu.memref_slice %arg2[%c0_i32_11] : memref<32x!tpu.dma_semaphore, #tpu.memory_space<semaphore_mem>> -> memref<1x!tpu.dma_semaphore, #tpu.memory_space<semaphore_mem>>
    %11 = tpu.memref_squeeze %10 : memref<1x!tpu.dma_semaphore, #tpu.memory_space<semaphore_mem>> -> memref<!tpu.dma_semaphore, #tpu.memory_space<semaphore_mem>>
    tpu.wait_dma2 semaphore(%11 : memref<!tpu.dma_semaphore, #tpu.memory_space<semaphore_mem>>) src(%8 : memref<4x1x128xf32, #tpu.memory_space<any>>) dst(%9 : memref<4x1x128xf32, #tpu.memory_space<any>>)
    %c1_i32_18 = arith.constant 1 : i32
    %c0_i32_19 = arith.constant 0 : i32
    %c1_i32_20 = arith.constant 1 : i32
    %c0_i32_21 = arith.constant 0 : i32
    %12 = tpu.memref_slice %arg0[%c0_i32_19, %c1_i32_20, %c0_i32_21] : memref<4x48x128xf32, #tpu.memory_space<any>> -> memref<4x1x128xf32, #tpu.memory_space<any>>
    %c4_i32_22 = arith.constant 4 : i32
    %c0_i32_23 = arith.constant 0 : i32
    %c0_i32_24 = arith.constant 0 : i32
    %13 = tpu.memref_slice %arg1[%c4_i32_22, %c0_i32_23, %c0_i32_24] : memref<100x1x128xf32, #tpu.memory_space<any>> -> memref<4x1x128xf32, #tpu.memory_space<any>>
    %14 = tpu.memref_slice %arg2[%c1_i32_18] : memref<32x!tpu.dma_semaphore, #tpu.memory_space<semaphore_mem>> -> memref<1x!tpu.dma_semaphore, #tpu.memory_space<semaphore_mem>>
    %15 = tpu.memref_squeeze %14 : memref<1x!tpu.dma_semaphore, #tpu.memory_space<semaphore_mem>> -> memref<!tpu.dma_semaphore, #tpu.memory_space<semaphore_mem>>
    tpu.wait_dma2 semaphore(%15 : memref<!tpu.dma_semaphore, #tpu.memory_space<semaphore_mem>>) src(%12 : memref<4x1x128xf32, #tpu.memory_space<any>>) dst(%13 : memref<4x1x128xf32, #tpu.memory_space<any>>)
    %c0_i32_25 = arith.constant 0 : i32
    %c0_i32_26 = arith.constant 0 : i32
    %c2_i32 = arith.constant 2 : i32
    %c0_i32_27 = arith.constant 0 : i32
    %16 = tpu.memref_slice %arg0[%c0_i32_26, %c2_i32, %c0_i32_27] : memref<4x48x128xf32, #tpu.memory_space<any>> -> memref<3x1x128xf32, #tpu.memory_space<any>>
    %c8_i32 = arith.constant 8 : i32
    %c0_i32_28 = arith.constant 0 : i32
    %c0_i32_29 = arith.constant 0 : i32
    %17 = tpu.memref_slice %arg1[%c8_i32, %c0_i32_28, %c0_i32_29] : memref<100x1x128xf32, #tpu.memory_space<any>> -> memref<3x1x128xf32, #tpu.memory_space<any>>
    %18 = tpu.memref_slice %arg2[%c0_i32_25] : memref<32x!tpu.dma_semaphore, #tpu.memory_space<semaphore_mem>> -> memref<1x!tpu.dma_semaphore, #tpu.memory_space<semaphore_mem>>
    %19 = tpu.memref_squeeze %18 : memref<1x!tpu.dma_semaphore, #tpu.memory_space<semaphore_mem>> -> memref<!tpu.dma_semaphore, #tpu.memory_space<semaphore_mem>>
    tpu.enqueue_dma source(%16 : memref<3x1x128xf32, #tpu.memory_space<any>>) target(%17 : memref<3x1x128xf32, #tpu.memory_space<any>>) target_semaphore(%19 : memref<!tpu.dma_semaphore, #tpu.memory_space<semaphore_mem>>)
    %c1_i32_30 = arith.constant 1 : i32
    %c0_i32_31 = arith.constant 0 : i32
    %c3_i32 = arith.constant 3 : i32
    %c0_i32_32 = arith.constant 0 : i32
    %20 = tpu.memref_slice %arg0[%c0_i32_31, %c3_i32, %c0_i32_32] : memref<4x48x128xf32, #tpu.memory_space<any>> -> memref<3x1x128xf32, #tpu.memory_space<any>>
    %c11_i32 = arith.constant 11 : i32
    %c0_i32_33 = arith.constant 0 : i32
    %c0_i32_34 = arith.constant 0 : i32
    %21 = tpu.memref_slice %arg1[%c11_i32, %c0_i32_33, %c0_i32_34] : memref<100x1x128xf32, #tpu.memory_space<any>> -> memref<3x1x128xf32, #tpu.memory_space<any>>
    %22 = tpu.memref_slice %arg2[%c1_i32_30] : memref<32x!tpu.dma_semaphore, #tpu.memory_space<semaphore_mem>> -> memref<1x!tpu.dma_semaphore, #tpu.memory_space<semaphore_mem>>
    %23 = tpu.memref_squeeze %22 : memref<1x!tpu.dma_semaphore, #tpu.memory_space<semaphore_mem>> -> memref<!tpu.dma_semaphore, #tpu.memory_space<semaphore_mem>>
    tpu.enqueue_dma source(%20 : memref<3x1x128xf32, #tpu.memory_space<any>>) target(%21 : memref<3x1x128xf32, #tpu.memory_space<any>>) target_semaphore(%23 : memref<!tpu.dma_semaphore, #tpu.memory_space<semaphore_mem>>)
    %c2_i32_35 = arith.constant 2 : i32
    %c0_i32_36 = arith.constant 0 : i32
    %c4_i32_37 = arith.constant 4 : i32
    %c0_i32_38 = arith.constant 0 : i32
    %24 = tpu.memref_slice %arg0[%c0_i32_36, %c4_i32_37, %c0_i32_38] : memref<4x48x128xf32, #tpu.memory_space<any>> -> memref<3x1x128xf32, #tpu.memory_space<any>>
    %c14_i32 = arith.constant 14 : i32
    %c0_i32_39 = arith.constant 0 : i32
    %c0_i32_40 = arith.constant 0 : i32
    %25 = tpu.memref_slice %arg1[%c14_i32, %c0_i32_39, %c0_i32_40] : memref<100x1x128xf32, #tpu.memory_space<any>> -> memref<3x1x128xf32, #tpu.memory_space<any>>
    %26 = tpu.memref_slice %arg2[%c2_i32_35] : memref<32x!tpu.dma_semaphore, #tpu.memory_space<semaphore_mem>> -> memref<1x!tpu.dma_semaphore, #tpu.memory_space<semaphore_mem>>
    %27 = tpu.memref_squeeze %26 : memref<1x!tpu.dma_semaphore, #tpu.memory_space<semaphore_mem>> -> memref<!tpu.dma_semaphore, #tpu.memory_space<semaphore_mem>>
    tpu.enqueue_dma source(%24 : memref<3x1x128xf32, #tpu.memory_space<any>>) target(%25 : memref<3x1x128xf32, #tpu.memory_space<any>>) target_semaphore(%27 : memref<!tpu.dma_semaphore, #tpu.memory_space<semaphore_mem>>)
    %c3_i32_41 = arith.constant 3 : i32
    %c0_i32_42 = arith.constant 0 : i32
    %c5_i32 = arith.constant 5 : i32
    %c0_i32_43 = arith.constant 0 : i32
    %28 = tpu.memref_slice %arg0[%c0_i32_42, %c5_i32, %c0_i32_43] : memref<4x48x128xf32, #tpu.memory_space<any>> -> memref<3x1x128xf32, #tpu.memory_space<any>>
    %c17_i32 = arith.constant 17 : i32
    %c0_i32_44 = arith.constant 0 : i32
    %c0_i32_45 = arith.constant 0 : i32
    %29 = tpu.memref_slice %arg1[%c17_i32, %c0_i32_44, %c0_i32_45] : memref<100x1x128xf32, #tpu.memory_space<any>> -> memref<3x1x128xf32, #tpu.memory_space<any>>
    %30 = tpu.memref_slice %arg2[%c3_i32_41] : memref<32x!tpu.dma_semaphore, #tpu.memory_space<semaphore_mem>> -> memref<1x!tpu.dma_semaphore, #tpu.memory_space<semaphore_mem>>
    %31 = tpu.memref_squeeze %30 : memref<1x!tpu.dma_semaphore, #tpu.memory_space<semaphore_mem>> -> memref<!tpu.dma_semaphore, #tpu.memory_space<semaphore_mem>>
    tpu.enqueue_dma source(%28 : memref<3x1x128xf32, #tpu.memory_space<any>>) target(%29 : memref<3x1x128xf32, #tpu.memory_space<any>>) target_semaphore(%31 : memref<!tpu.dma_semaphore, #tpu.memory_space<semaphore_mem>>)
    %c0_i32_46 = arith.constant 0 : i32
    %c0_i32_47 = arith.constant 0 : i32
    %c2_i32_48 = arith.constant 2 : i32
    %c0_i32_49 = arith.constant 0 : i32
    %32 = tpu.memref_slice %arg0[%c0_i32_47, %c2_i32_48, %c0_i32_49] : memref<4x48x128xf32, #tpu.memory_space<any>> -> memref<3x1x128xf32, #tpu.memory_space<any>>
    %c8_i32_50 = arith.constant 8 : i32
    %c0_i32_51 = arith.constant 0 : i32
    %c0_i32_52 = arith.constant 0 : i32
    %33 = tpu.memref_slice %arg1[%c8_i32_50, %c0_i32_51, %c0_i32_52] : memref<100x1x128xf32, #tpu.memory_space<any>> -> memref<3x1x128xf32, #tpu.memory_space<any>>
    %34 = tpu.memref_slice %arg2[%c0_i32_46] : memref<32x!tpu.dma_semaphore, #tpu.memory_space<semaphore_mem>> -> memref<1x!tpu.dma_semaphore, #tpu.memory_space<semaphore_mem>>
    %35 = tpu.memref_squeeze %34 : memref<1x!tpu.dma_semaphore, #tpu.memory_space<semaphore_mem>> -> memref<!tpu.dma_semaphore, #tpu.memory_space<semaphore_mem>>
    tpu.wait_dma2 semaphore(%35 : memref<!tpu.dma_semaphore, #tpu.memory_space<semaphore_mem>>) src(%32 : memref<3x1x128xf32, #tpu.memory_space<any>>) dst(%33 : memref<3x1x128xf32, #tpu.memory_space<any>>)
    %c1_i32_53 = arith.constant 1 : i32
    %c0_i32_54 = arith.constant 0 : i32
    %c3_i32_55 = arith.constant 3 : i32
    %c0_i32_56 = arith.constant 0 : i32
    %36 = tpu.memref_slice %arg0[%c0_i32_54, %c3_i32_55, %c0_i32_56] : memref<4x48x128xf32, #tpu.memory_space<any>> -> memref<3x1x128xf32, #tpu.memory_space<any>>
    %c11_i32_57 = arith.constant 11 : i32
    %c0_i32_58 = arith.constant 0 : i32
    %c0_i32_59 = arith.constant 0 : i32
    %37 = tpu.memref_slice %arg1[%c11_i32_57, %c0_i32_58, %c0_i32_59] : memref<100x1x128xf32, #tpu.memory_space<any>> -> memref<3x1x128xf32, #tpu.memory_space<any>>
    %38 = tpu.memref_slice %arg2[%c1_i32_53] : memref<32x!tpu.dma_semaphore, #tpu.memory_space<semaphore_mem>> -> memref<1x!tpu.dma_semaphore, #tpu.memory_space<semaphore_mem>>
    %39 = tpu.memref_squeeze %38 : memref<1x!tpu.dma_semaphore, #tpu.memory_space<semaphore_mem>> -> memref<!tpu.dma_semaphore, #tpu.memory_space<semaphore_mem>>
    tpu.wait_dma2 semaphore(%39 : memref<!tpu.dma_semaphore, #tpu.memory_space<semaphore_mem>>) src(%36 : memref<3x1x128xf32, #tpu.memory_space<any>>) dst(%37 : memref<3x1x128xf32, #tpu.memory_space<any>>)
    %c2_i32_60 = arith.constant 2 : i32
    %c0_i32_61 = arith.constant 0 : i32
    %c4_i32_62 = arith.constant 4 : i32
    %c0_i32_63 = arith.constant 0 : i32
    %40 = tpu.memref_slice %arg0[%c0_i32_61, %c4_i32_62, %c0_i32_63] : memref<4x48x128xf32, #tpu.memory_space<any>> -> memref<3x1x128xf32, #tpu.memory_space<any>>
    %c14_i32_64 = arith.constant 14 : i32
    %c0_i32_65 = arith.constant 0 : i32
    %c0_i32_66 = arith.constant 0 : i32
    %41 = tpu.memref_slice %arg1[%c14_i32_64, %c0_i32_65, %c0_i32_66] : memref<100x1x128xf32, #tpu.memory_space<any>> -> memref<3x1x128xf32, #tpu.memory_space<any>>
    %42 = tpu.memref_slice %arg2[%c2_i32_60] : memref<32x!tpu.dma_semaphore, #tpu.memory_space<semaphore_mem>> -> memref<1x!tpu.dma_semaphore, #tpu.memory_space<semaphore_mem>>
    %43 = tpu.memref_squeeze %42 : memref<1x!tpu.dma_semaphore, #tpu.memory_space<semaphore_mem>> -> memref<!tpu.dma_semaphore, #tpu.memory_space<semaphore_mem>>
    tpu.wait_dma2 semaphore(%43 : memref<!tpu.dma_semaphore, #tpu.memory_space<semaphore_mem>>) src(%40 : memref<3x1x128xf32, #tpu.memory_space<any>>) dst(%41 : memref<3x1x128xf32, #tpu.memory_space<any>>)
    %c3_i32_67 = arith.constant 3 : i32
    %c0_i32_68 = arith.constant 0 : i32
    %c5_i32_69 = arith.constant 5 : i32
    %c0_i32_70 = arith.constant 0 : i32
    %44 = tpu.memref_slice %arg0[%c0_i32_68, %c5_i32_69, %c0_i32_70] : memref<4x48x128xf32, #tpu.memory_space<any>> -> memref<3x1x128xf32, #tpu.memory_space<any>>
    %c17_i32_71 = arith.constant 17 : i32
    %c0_i32_72 = arith.constant 0 : i32
    %c0_i32_73 = arith.constant 0 : i32
    %45 = tpu.memref_slice %arg1[%c17_i32_71, %c0_i32_72, %c0_i32_73] : memref<100x1x128xf32, #tpu.memory_space<any>> -> memref<3x1x128xf32, #tpu.memory_space<any>>
    %46 = tpu.memref_slice %arg2[%c3_i32_67] : memref<32x!tpu.dma_semaphore, #tpu.memory_space<semaphore_mem>> -> memref<1x!tpu.dma_semaphore, #tpu.memory_space<semaphore_mem>>
    %47 = tpu.memref_squeeze %46 : memref<1x!tpu.dma_semaphore, #tpu.memory_space<semaphore_mem>> -> memref<!tpu.dma_semaphore, #tpu.memory_space<semaphore_mem>>
    tpu.wait_dma2 semaphore(%47 : memref<!tpu.dma_semaphore, #tpu.memory_space<semaphore_mem>>) src(%44 : memref<3x1x128xf32, #tpu.memory_space<any>>) dst(%45 : memref<3x1x128xf32, #tpu.memory_space<any>>)
    %c0_i32_74 = arith.constant 0 : i32
    %c32_i32 = arith.constant 32 : i32
    %48 = arith.addi %c0_i32_74, %c32_i32 : i32
    %c1_i32_75 = arith.constant 1 : i32
    scf.for %arg3 = %c0_i32_74 to %48 step %c1_i32_75  : i32 {
      %c1_i32_132 = arith.constant 1 : i32
      %83 = arith.muli %arg3, %c1_i32_132 : i32
      %c0_i32_133 = arith.constant 0 : i32
      %84 = arith.addi %c0_i32_133, %83 : i32
      %c6_i32_134 = arith.constant 6 : i32
      %85 = arith.addi %c6_i32_134, %84 : i32
      %c2_i32_135 = arith.constant 2 : i32
      %86 = arith.muli %84, %c2_i32_135 : i32
      %c20_i32 = arith.constant 20 : i32
      %87 = arith.addi %c20_i32, %86 : i32
      %c32_i32_136 = arith.constant 32 : i32
      %c0_i32_137 = arith.constant 0 : i32
      %88 = arith.cmpi eq, %c32_i32_136, %c0_i32_137 : i32
      %c1_i32_138 = arith.constant 1 : i32
      %89 = arith.select %88, %c1_i32_138, %c32_i32_136 : i32
      %90 = arith.remsi %84, %89 : i32
      %c0_i32_139 = arith.constant 0 : i32
      %91 = arith.cmpi ne, %90, %c0_i32_139 : i32
      %c0_i32_140 = arith.constant 0 : i32
      %92 = arith.cmpi slt, %90, %c0_i32_140 : i32
      %c0_i32_141 = arith.constant 0 : i32
      %93 = arith.cmpi slt, %89, %c0_i32_141 : i32
      %94 = arith.xori %92, %93 : i1
      %95 = arith.andi %94, %91 : i1
      %96 = arith.addi %90, %89 : i32
      %97 = arith.select %95, %96, %90 : i32
      %c0_i32_142 = arith.constant 0 : i32
      %c0_i32_143 = arith.constant 0 : i32
      %98 = tpu.memref_slice %arg0[%c0_i32_142, %85, %c0_i32_143] : memref<4x48x128xf32, #tpu.memory_space<any>> -> memref<2x1x128xf32, #tpu.memory_space<any>>
      %c0_i32_144 = arith.constant 0 : i32
      %c0_i32_145 = arith.constant 0 : i32
      %99 = tpu.memref_slice %arg1[%87, %c0_i32_144, %c0_i32_145] : memref<100x1x128xf32, #tpu.memory_space<any>> -> memref<2x1x128xf32, #tpu.memory_space<any>>
      %100 = tpu.memref_slice %arg2[%97] : memref<32x!tpu.dma_semaphore, #tpu.memory_space<semaphore_mem>> -> memref<1x!tpu.dma_semaphore, #tpu.memory_space<semaphore_mem>>
      %101 = tpu.memref_squeeze %100 : memref<1x!tpu.dma_semaphore, #tpu.memory_space<semaphore_mem>> -> memref<!tpu.dma_semaphore, #tpu.memory_space<semaphore_mem>>
      tpu.enqueue_dma source(%98 : memref<2x1x128xf32, #tpu.memory_space<any>>) target(%99 : memref<2x1x128xf32, #tpu.memory_space<any>>) target_semaphore(%101 : memref<!tpu.dma_semaphore, #tpu.memory_space<semaphore_mem>>)
    }
    %c32_i32_76 = arith.constant 32 : i32
    %c0_i32_77 = arith.constant 0 : i32
    %c6_i32 = arith.constant 6 : i32
    %49 = arith.addi %c0_i32_77, %c6_i32 : i32
    %c1_i32_78 = arith.constant 1 : i32
    scf.for %arg3 = %c0_i32_77 to %49 step %c1_i32_78  : i32 {
      %c1_i32_132 = arith.constant 1 : i32
      %83 = arith.muli %arg3, %c1_i32_132 : i32
      %c32_i32_133 = arith.constant 32 : i32
      %84 = arith.addi %c32_i32_133, %83 : i32
      %c32_i32_134 = arith.constant 32 : i32
      %85 = arith.subi %84, %c32_i32_134 : i32
      %c6_i32_135 = arith.constant 6 : i32
      %86 = arith.addi %c6_i32_135, %85 : i32
      %c2_i32_136 = arith.constant 2 : i32
      %87 = arith.muli %85, %c2_i32_136 : i32
      %c20_i32 = arith.constant 20 : i32
      %88 = arith.addi %c20_i32, %87 : i32
      %c32_i32_137 = arith.constant 32 : i32
      %c0_i32_138 = arith.constant 0 : i32
      %89 = arith.cmpi eq, %c32_i32_137, %c0_i32_138 : i32
      %c1_i32_139 = arith.constant 1 : i32
      %90 = arith.select %89, %c1_i32_139, %c32_i32_137 : i32
      %91 = arith.remsi %85, %90 : i32
      %c0_i32_140 = arith.constant 0 : i32
      %92 = arith.cmpi ne, %91, %c0_i32_140 : i32
      %c0_i32_141 = arith.constant 0 : i32
      %93 = arith.cmpi slt, %91, %c0_i32_141 : i32
      %c0_i32_142 = arith.constant 0 : i32
      %94 = arith.cmpi slt, %90, %c0_i32_142 : i32
      %95 = arith.xori %93, %94 : i1
      %96 = arith.andi %95, %92 : i1
      %97 = arith.addi %91, %90 : i32
      %98 = arith.select %96, %97, %91 : i32
      %c0_i32_143 = arith.constant 0 : i32
      %c0_i32_144 = arith.constant 0 : i32
      %99 = tpu.memref_slice %arg0[%c0_i32_143, %86, %c0_i32_144] : memref<4x48x128xf32, #tpu.memory_space<any>> -> memref<2x1x128xf32, #tpu.memory_space<any>>
      %c0_i32_145 = arith.constant 0 : i32
      %c0_i32_146 = arith.constant 0 : i32
      %100 = tpu.memref_slice %arg1[%88, %c0_i32_145, %c0_i32_146] : memref<100x1x128xf32, #tpu.memory_space<any>> -> memref<2x1x128xf32, #tpu.memory_space<any>>
      %101 = tpu.memref_slice %arg2[%98] : memref<32x!tpu.dma_semaphore, #tpu.memory_space<semaphore_mem>> -> memref<1x!tpu.dma_semaphore, #tpu.memory_space<semaphore_mem>>
      %102 = tpu.memref_squeeze %101 : memref<1x!tpu.dma_semaphore, #tpu.memory_space<semaphore_mem>> -> memref<!tpu.dma_semaphore, #tpu.memory_space<semaphore_mem>>
      tpu.wait_dma2 semaphore(%102 : memref<!tpu.dma_semaphore, #tpu.memory_space<semaphore_mem>>) src(%99 : memref<2x1x128xf32, #tpu.memory_space<any>>) dst(%100 : memref<2x1x128xf32, #tpu.memory_space<any>>)
      %c6_i32_147 = arith.constant 6 : i32
      %103 = arith.addi %c6_i32_147, %84 : i32
      %c2_i32_148 = arith.constant 2 : i32
      %104 = arith.muli %84, %c2_i32_148 : i32
      %c20_i32_149 = arith.constant 20 : i32
      %105 = arith.addi %c20_i32_149, %104 : i32
      %c32_i32_150 = arith.constant 32 : i32
      %c0_i32_151 = arith.constant 0 : i32
      %106 = arith.cmpi eq, %c32_i32_150, %c0_i32_151 : i32
      %c1_i32_152 = arith.constant 1 : i32
      %107 = arith.select %106, %c1_i32_152, %c32_i32_150 : i32
      %108 = arith.remsi %84, %107 : i32
      %c0_i32_153 = arith.constant 0 : i32
      %109 = arith.cmpi ne, %108, %c0_i32_153 : i32
      %c0_i32_154 = arith.constant 0 : i32
      %110 = arith.cmpi slt, %108, %c0_i32_154 : i32
      %c0_i32_155 = arith.constant 0 : i32
      %111 = arith.cmpi slt, %107, %c0_i32_155 : i32
      %112 = arith.xori %110, %111 : i1
      %113 = arith.andi %112, %109 : i1
      %114 = arith.addi %108, %107 : i32
      %115 = arith.select %113, %114, %108 : i32
      %c0_i32_156 = arith.constant 0 : i32
      %c0_i32_157 = arith.constant 0 : i32
      %116 = tpu.memref_slice %arg0[%c0_i32_156, %103, %c0_i32_157] : memref<4x48x128xf32, #tpu.memory_space<any>> -> memref<2x1x128xf32, #tpu.memory_space<any>>
      %c0_i32_158 = arith.constant 0 : i32
      %c0_i32_159 = arith.constant 0 : i32
      %117 = tpu.memref_slice %arg1[%105, %c0_i32_158, %c0_i32_159] : memref<100x1x128xf32, #tpu.memory_space<any>> -> memref<2x1x128xf32, #tpu.memory_space<any>>
      %118 = tpu.memref_slice %arg2[%115] : memref<32x!tpu.dma_semaphore, #tpu.memory_space<semaphore_mem>> -> memref<1x!tpu.dma_semaphore, #tpu.memory_space<semaphore_mem>>
      %119 = tpu.memref_squeeze %118 : memref<1x!tpu.dma_semaphore, #tpu.memory_space<semaphore_mem>> -> memref<!tpu.dma_semaphore, #tpu.memory_space<semaphore_mem>>
      tpu.enqueue_dma source(%116 : memref<2x1x128xf32, #tpu.memory_space<any>>) target(%117 : memref<2x1x128xf32, #tpu.memory_space<any>>) target_semaphore(%119 : memref<!tpu.dma_semaphore, #tpu.memory_space<semaphore_mem>>)
    }
    %c6_i32_79 = arith.constant 6 : i32
    %c0_i32_80 = arith.constant 0 : i32
    %c32_i32_81 = arith.constant 32 : i32
    %50 = arith.addi %c0_i32_80, %c32_i32_81 : i32
    %c1_i32_82 = arith.constant 1 : i32
    scf.for %arg3 = %c0_i32_80 to %50 step %c1_i32_82  : i32 {
      %c1_i32_132 = arith.constant 1 : i32
      %83 = arith.muli %arg3, %c1_i32_132 : i32
      %c6_i32_133 = arith.constant 6 : i32
      %84 = arith.addi %c6_i32_133, %83 : i32
      %c6_i32_134 = arith.constant 6 : i32
      %85 = arith.addi %c6_i32_134, %84 : i32
      %c2_i32_135 = arith.constant 2 : i32
      %86 = arith.muli %84, %c2_i32_135 : i32
      %c20_i32 = arith.constant 20 : i32
      %87 = arith.addi %c20_i32, %86 : i32
      %c32_i32_136 = arith.constant 32 : i32
      %c0_i32_137 = arith.constant 0 : i32
      %88 = arith.cmpi eq, %c32_i32_136, %c0_i32_137 : i32
      %c1_i32_138 = arith.constant 1 : i32
      %89 = arith.select %88, %c1_i32_138, %c32_i32_136 : i32
      %90 = arith.remsi %84, %89 : i32
      %c0_i32_139 = arith.constant 0 : i32
      %91 = arith.cmpi ne, %90, %c0_i32_139 : i32
      %c0_i32_140 = arith.constant 0 : i32
      %92 = arith.cmpi slt, %90, %c0_i32_140 : i32
      %c0_i32_141 = arith.constant 0 : i32
      %93 = arith.cmpi slt, %89, %c0_i32_141 : i32
      %94 = arith.xori %92, %93 : i1
      %95 = arith.andi %94, %91 : i1
      %96 = arith.addi %90, %89 : i32
      %97 = arith.select %95, %96, %90 : i32
      %c0_i32_142 = arith.constant 0 : i32
      %c0_i32_143 = arith.constant 0 : i32
      %98 = tpu.memref_slice %arg0[%c0_i32_142, %85, %c0_i32_143] : memref<4x48x128xf32, #tpu.memory_space<any>> -> memref<2x1x128xf32, #tpu.memory_space<any>>
      %c0_i32_144 = arith.constant 0 : i32
      %c0_i32_145 = arith.constant 0 : i32
      %99 = tpu.memref_slice %arg1[%87, %c0_i32_144, %c0_i32_145] : memref<100x1x128xf32, #tpu.memory_space<any>> -> memref<2x1x128xf32, #tpu.memory_space<any>>
      %100 = tpu.memref_slice %arg2[%97] : memref<32x!tpu.dma_semaphore, #tpu.memory_space<semaphore_mem>> -> memref<1x!tpu.dma_semaphore, #tpu.memory_space<semaphore_mem>>
      %101 = tpu.memref_squeeze %100 : memref<1x!tpu.dma_semaphore, #tpu.memory_space<semaphore_mem>> -> memref<!tpu.dma_semaphore, #tpu.memory_space<semaphore_mem>>
      tpu.wait_dma2 semaphore(%101 : memref<!tpu.dma_semaphore, #tpu.memory_space<semaphore_mem>>) src(%98 : memref<2x1x128xf32, #tpu.memory_space<any>>) dst(%99 : memref<2x1x128xf32, #tpu.memory_space<any>>)
    }
    %c32_i32_83 = arith.constant 32 : i32
    %c0_i32_84 = arith.constant 0 : i32
    %c0_i32_85 = arith.constant 0 : i32
    %c44_i32 = arith.constant 44 : i32
    %c0_i32_86 = arith.constant 0 : i32
    %51 = tpu.memref_slice %arg0[%c0_i32_85, %c44_i32, %c0_i32_86] : memref<4x48x128xf32, #tpu.memory_space<any>> -> memref<1x1x128xf32, #tpu.memory_space<any>>
    %c96_i32 = arith.constant 96 : i32
    %c0_i32_87 = arith.constant 0 : i32
    %c0_i32_88 = arith.constant 0 : i32
    %52 = tpu.memref_slice %arg1[%c96_i32, %c0_i32_87, %c0_i32_88] : memref<100x1x128xf32, #tpu.memory_space<any>> -> memref<1x1x128xf32, #tpu.memory_space<any>>
    %53 = tpu.memref_slice %arg2[%c0_i32_84] : memref<32x!tpu.dma_semaphore, #tpu.memory_space<semaphore_mem>> -> memref<1x!tpu.dma_semaphore, #tpu.memory_space<semaphore_mem>>
    %54 = tpu.memref_squeeze %53 : memref<1x!tpu.dma_semaphore, #tpu.memory_space<semaphore_mem>> -> memref<!tpu.dma_semaphore, #tpu.memory_space<semaphore_mem>>
    tpu.enqueue_dma source(%51 : memref<1x1x128xf32, #tpu.memory_space<any>>) target(%52 : memref<1x1x128xf32, #tpu.memory_space<any>>) target_semaphore(%54 : memref<!tpu.dma_semaphore, #tpu.memory_space<semaphore_mem>>)
    %c1_i32_89 = arith.constant 1 : i32
    %c0_i32_90 = arith.constant 0 : i32
    %c45_i32 = arith.constant 45 : i32
    %c0_i32_91 = arith.constant 0 : i32
    %55 = tpu.memref_slice %arg0[%c0_i32_90, %c45_i32, %c0_i32_91] : memref<4x48x128xf32, #tpu.memory_space<any>> -> memref<1x1x128xf32, #tpu.memory_space<any>>
    %c97_i32 = arith.constant 97 : i32
    %c0_i32_92 = arith.constant 0 : i32
    %c0_i32_93 = arith.constant 0 : i32
    %56 = tpu.memref_slice %arg1[%c97_i32, %c0_i32_92, %c0_i32_93] : memref<100x1x128xf32, #tpu.memory_space<any>> -> memref<1x1x128xf32, #tpu.memory_space<any>>
    %57 = tpu.memref_slice %arg2[%c1_i32_89] : memref<32x!tpu.dma_semaphore, #tpu.memory_space<semaphore_mem>> -> memref<1x!tpu.dma_semaphore, #tpu.memory_space<semaphore_mem>>
    %58 = tpu.memref_squeeze %57 : memref<1x!tpu.dma_semaphore, #tpu.memory_space<semaphore_mem>> -> memref<!tpu.dma_semaphore, #tpu.memory_space<semaphore_mem>>
    tpu.enqueue_dma source(%55 : memref<1x1x128xf32, #tpu.memory_space<any>>) target(%56 : memref<1x1x128xf32, #tpu.memory_space<any>>) target_semaphore(%58 : memref<!tpu.dma_semaphore, #tpu.memory_space<semaphore_mem>>)
    %c2_i32_94 = arith.constant 2 : i32
    %c0_i32_95 = arith.constant 0 : i32
    %c46_i32 = arith.constant 46 : i32
    %c0_i32_96 = arith.constant 0 : i32
    %59 = tpu.memref_slice %arg0[%c0_i32_95, %c46_i32, %c0_i32_96] : memref<4x48x128xf32, #tpu.memory_space<any>> -> memref<1x1x128xf32, #tpu.memory_space<any>>
    %c98_i32 = arith.constant 98 : i32
    %c0_i32_97 = arith.constant 0 : i32
    %c0_i32_98 = arith.constant 0 : i32
    %60 = tpu.memref_slice %arg1[%c98_i32, %c0_i32_97, %c0_i32_98] : memref<100x1x128xf32, #tpu.memory_space<any>> -> memref<1x1x128xf32, #tpu.memory_space<any>>
    %61 = tpu.memref_slice %arg2[%c2_i32_94] : memref<32x!tpu.dma_semaphore, #tpu.memory_space<semaphore_mem>> -> memref<1x!tpu.dma_semaphore, #tpu.memory_space<semaphore_mem>>
    %62 = tpu.memref_squeeze %61 : memref<1x!tpu.dma_semaphore, #tpu.memory_space<semaphore_mem>> -> memref<!tpu.dma_semaphore, #tpu.memory_space<semaphore_mem>>
    tpu.enqueue_dma source(%59 : memref<1x1x128xf32, #tpu.memory_space<any>>) target(%60 : memref<1x1x128xf32, #tpu.memory_space<any>>) target_semaphore(%62 : memref<!tpu.dma_semaphore, #tpu.memory_space<semaphore_mem>>)
    %c3_i32_99 = arith.constant 3 : i32
    %c0_i32_100 = arith.constant 0 : i32
    %c47_i32 = arith.constant 47 : i32
    %c0_i32_101 = arith.constant 0 : i32
    %63 = tpu.memref_slice %arg0[%c0_i32_100, %c47_i32, %c0_i32_101] : memref<4x48x128xf32, #tpu.memory_space<any>> -> memref<1x1x128xf32, #tpu.memory_space<any>>
    %c99_i32 = arith.constant 99 : i32
    %c0_i32_102 = arith.constant 0 : i32
    %c0_i32_103 = arith.constant 0 : i32
    %64 = tpu.memref_slice %arg1[%c99_i32, %c0_i32_102, %c0_i32_103] : memref<100x1x128xf32, #tpu.memory_space<any>> -> memref<1x1x128xf32, #tpu.memory_space<any>>
    %65 = tpu.memref_slice %arg2[%c3_i32_99] : memref<32x!tpu.dma_semaphore, #tpu.memory_space<semaphore_mem>> -> memref<1x!tpu.dma_semaphore, #tpu.memory_space<semaphore_mem>>
    %66 = tpu.memref_squeeze %65 : memref<1x!tpu.dma_semaphore, #tpu.memory_space<semaphore_mem>> -> memref<!tpu.dma_semaphore, #tpu.memory_space<semaphore_mem>>
    tpu.enqueue_dma source(%63 : memref<1x1x128xf32, #tpu.memory_space<any>>) target(%64 : memref<1x1x128xf32, #tpu.memory_space<any>>) target_semaphore(%66 : memref<!tpu.dma_semaphore, #tpu.memory_space<semaphore_mem>>)
    %c0_i32_104 = arith.constant 0 : i32
    %c0_i32_105 = arith.constant 0 : i32
    %c44_i32_106 = arith.constant 44 : i32
    %c0_i32_107 = arith.constant 0 : i32
    %67 = tpu.memref_slice %arg0[%c0_i32_105, %c44_i32_106, %c0_i32_107] : memref<4x48x128xf32, #tpu.memory_space<any>> -> memref<1x1x128xf32, #tpu.memory_space<any>>
    %c96_i32_108 = arith.constant 96 : i32
    %c0_i32_109 = arith.constant 0 : i32
    %c0_i32_110 = arith.constant 0 : i32
    %68 = tpu.memref_slice %arg1[%c96_i32_108, %c0_i32_109, %c0_i32_110] : memref<100x1x128xf32, #tpu.memory_space<any>> -> memref<1x1x128xf32, #tpu.memory_space<any>>
    %69 = tpu.memref_slice %arg2[%c0_i32_104] : memref<32x!tpu.dma_semaphore, #tpu.memory_space<semaphore_mem>> -> memref<1x!tpu.dma_semaphore, #tpu.memory_space<semaphore_mem>>
    %70 = tpu.memref_squeeze %69 : memref<1x!tpu.dma_semaphore, #tpu.memory_space<semaphore_mem>> -> memref<!tpu.dma_semaphore, #tpu.memory_space<semaphore_mem>>
    tpu.wait_dma2 semaphore(%70 : memref<!tpu.dma_semaphore, #tpu.memory_space<semaphore_mem>>) src(%67 : memref<1x1x128xf32, #tpu.memory_space<any>>) dst(%68 : memref<1x1x128xf32, #tpu.memory_space<any>>)
    %c1_i32_111 = arith.constant 1 : i32
    %c0_i32_112 = arith.constant 0 : i32
    %c45_i32_113 = arith.constant 45 : i32
    %c0_i32_114 = arith.constant 0 : i32
    %71 = tpu.memref_slice %arg0[%c0_i32_112, %c45_i32_113, %c0_i32_114] : memref<4x48x128xf32, #tpu.memory_space<any>> -> memref<1x1x128xf32, #tpu.memory_space<any>>
    %c97_i32_115 = arith.constant 97 : i32
    %c0_i32_116 = arith.constant 0 : i32
    %c0_i32_117 = arith.constant 0 : i32
    %72 = tpu.memref_slice %arg1[%c97_i32_115, %c0_i32_116, %c0_i32_117] : memref<100x1x128xf32, #tpu.memory_space<any>> -> memref<1x1x128xf32, #tpu.memory_space<any>>
    %73 = tpu.memref_slice %arg2[%c1_i32_111] : memref<32x!tpu.dma_semaphore, #tpu.memory_space<semaphore_mem>> -> memref<1x!tpu.dma_semaphore, #tpu.memory_space<semaphore_mem>>
    %74 = tpu.memref_squeeze %73 : memref<1x!tpu.dma_semaphore, #tpu.memory_space<semaphore_mem>> -> memref<!tpu.dma_semaphore, #tpu.memory_space<semaphore_mem>>
    tpu.wait_dma2 semaphore(%74 : memref<!tpu.dma_semaphore, #tpu.memory_space<semaphore_mem>>) src(%71 : memref<1x1x128xf32, #tpu.memory_space<any>>) dst(%72 : memref<1x1x128xf32, #tpu.memory_space<any>>)
    %c2_i32_118 = arith.constant 2 : i32
    %c0_i32_119 = arith.constant 0 : i32
    %c46_i32_120 = arith.constant 46 : i32
    %c0_i32_121 = arith.constant 0 : i32
    %75 = tpu.memref_slice %arg0[%c0_i32_119, %c46_i32_120, %c0_i32_121] : memref<4x48x128xf32, #tpu.memory_space<any>> -> memref<1x1x128xf32, #tpu.memory_space<any>>
    %c98_i32_122 = arith.constant 98 : i32
    %c0_i32_123 = arith.constant 0 : i32
    %c0_i32_124 = arith.constant 0 : i32
    %76 = tpu.memref_slice %arg1[%c98_i32_122, %c0_i32_123, %c0_i32_124] : memref<100x1x128xf32, #tpu.memory_space<any>> -> memref<1x1x128xf32, #tpu.memory_space<any>>
    %77 = tpu.memref_slice %arg2[%c2_i32_118] : memref<32x!tpu.dma_semaphore, #tpu.memory_space<semaphore_mem>> -> memref<1x!tpu.dma_semaphore, #tpu.memory_space<semaphore_mem>>
    %78 = tpu.memref_squeeze %77 : memref<1x!tpu.dma_semaphore, #tpu.memory_space<semaphore_mem>> -> memref<!tpu.dma_semaphore, #tpu.memory_space<semaphore_mem>>
    tpu.wait_dma2 semaphore(%78 : memref<!tpu.dma_semaphore, #tpu.memory_space<semaphore_mem>>) src(%75 : memref<1x1x128xf32, #tpu.memory_space<any>>) dst(%76 : memref<1x1x128xf32, #tpu.memory_space<any>>)
    %c3_i32_125 = arith.constant 3 : i32
    %c0_i32_126 = arith.constant 0 : i32
    %c47_i32_127 = arith.constant 47 : i32
    %c0_i32_128 = arith.constant 0 : i32
    %79 = tpu.memref_slice %arg0[%c0_i32_126, %c47_i32_127, %c0_i32_128] : memref<4x48x128xf32, #tpu.memory_space<any>> -> memref<1x1x128xf32, #tpu.memory_space<any>>
    %c99_i32_129 = arith.constant 99 : i32
    %c0_i32_130 = arith.constant 0 : i32
    %c0_i32_131 = arith.constant 0 : i32
    %80 = tpu.memref_slice %arg1[%c99_i32_129, %c0_i32_130, %c0_i32_131] : memref<100x1x128xf32, #tpu.memory_space<any>> -> memref<1x1x128xf32, #tpu.memory_space<any>>
    %81 = tpu.memref_slice %arg2[%c3_i32_125] : memref<32x!tpu.dma_semaphore, #tpu.memory_space<semaphore_mem>> -> memref<1x!tpu.dma_semaphore, #tpu.memory_space<semaphore_mem>>
    %82 = tpu.memref_squeeze %81 : memref<1x!tpu.dma_semaphore, #tpu.memory_space<semaphore_mem>> -> memref<!tpu.dma_semaphore, #tpu.memory_space<semaphore_mem>>
    tpu.wait_dma2 semaphore(%82 : memref<!tpu.dma_semaphore, #tpu.memory_space<semaphore_mem>>) src(%79 : memref<1x1x128xf32, #tpu.memory_space<any>>) dst(%80 : memref<1x1x128xf32, #tpu.memory_space<any>>)
    return
  }
}

</mosaic_0001>

<llo_original>
// kernel: packer.1
$region0: #{packer.1}
  #allocation0 [shape = 'u32[]', space=smem, size = 0x4, offset = 0x4, fixed_abs, tag = 'smem constant byte address 0x4 - core index']
  #allocation1 [shape = 'u32[144,128]{1,0:T(1,128)}', space=vmem, size = 0x12000, scoped, tag = 'internal scratch']
  #allocation2 [shape = 's32[32]{0}', space=sflag, size = 0x80, scoped, tag = 'scratch operand']
  #allocation3 [shape = 's32[]', space=sflag, size = 0x4, offset = 0, fixed_abs, tag = 'sflag constant byte address 0x0 - dummy sync flag']
  #allocation5 [shape = 's32[]', space=sflag, size = 0x4, offset = 0, fixed_abs, tag = 'sflag constant byte address 0x0 - dummy sync flag']
  #allocation7 [shape = 's32[]', space=sflag, size = 0x4, offset = 0, fixed_abs, tag = 'sflag constant byte address 0x0 - dummy sync flag']
  #allocation9 [shape = 's32[]', space=sflag, size = 0x4, offset = 0, fixed_abs, tag = 'sflag constant byte address 0x0 - dummy sync flag']
  #allocation11 [shape = 's32[]', space=sflag, size = 0x4, offset = 0, fixed_abs, tag = 'sflag constant byte address 0x0 - dummy sync flag']
  #allocation13 [shape = 's32[]', space=sflag, size = 0x4, offset = 0, fixed_abs, tag = 'sflag constant byte address 0x0 - dummy sync flag']
  #allocation15 [shape = 's32[]', space=sflag, size = 0x4, offset = 0, fixed_abs, tag = 'sflag constant byte address 0x0 - dummy sync flag']
  #allocation17 [shape = 's32[]', space=sflag, size = 0x4, offset = 0, fixed_abs, tag = 'sflag constant byte address 0x0 - dummy sync flag']
  #allocation19 [shape = 's32[]', space=sflag, size = 0x4, offset = 0, fixed_abs, tag = 'sflag constant byte address 0x0 - dummy sync flag']
  #allocation20 [shape = 'u32[0]{0}', space=smem, size = 0, offset = 0, fixed_abs, tag = 'smem constant byte address 0x0 - null']
  %s0 = inlined_call_operand.hbm [shape: f32[4,48,128], index: 0, kind: input, shape index: {}]
  %s1 = inlined_call_operand.hbm [shape: f32[100,128], index: 1, kind: output, shape index: {}]
  %s2 = sld [smem:[#allocation0]]
  $region23: #{packer.1} parent=0
    _
  %s4 = ssub.s32 1, %s2
  %s5 = scalar_select 0, %s4, %s2
  $region1: #{packer.1} parent=0
    #allocation4 [shape = 'u32[3]{0}', space=smem, size = 0xc, scoped, tag = 'DMA stride descriptor']
    #allocation6 [shape = 'u32[3]{0}', space=smem, size = 0xc, scoped, tag = 'DMA stride descriptor']
    #allocation8 [shape = 'u32[3]{0}', space=smem, size = 0xc, scoped, tag = 'DMA stride descriptor']
    #allocation10 [shape = 'u32[3]{0}', space=smem, size = 0xc, scoped, tag = 'DMA stride descriptor']
    #allocation12 [shape = 'u32[3]{0}', space=smem, size = 0xc, scoped, tag = 'DMA stride descriptor']
    #allocation14 [shape = 'u32[3]{0}', space=smem, size = 0xc, scoped, tag = 'DMA stride descriptor']
    %s7 = sshll.u32 1, 14
    %s8 = sxor.u32 4294967295, %s7
    %s11 = sshll.u32 3, 24
    %s12 = sxor.u32 4294967295, %s11
    %s13 = sand.u32 0, %s12
    %s15 = sor.u32 %s13, 0
    %18 = sst [smem:[#allocation4]] 768
    %s19 = scalar_lea.smem [#allocation4], 1
    %20 = sst [smem:[%s19]] 16
    %s21 = scalar_lea.smem [#allocation4], 2
    %22 = sst [smem:[%s21]] 1
    %24 = dma.general %s0, 64, %s1, [#allocation2], [#allocation3], [#allocation4], %s15, 0
    %s25 = scalar_lea.hbm %s0, 16
    %s26 = scalar_lea.hbm %s1, 64
    %s27 = scalar_lea.sflag [#allocation2], 1
    %s29 = sshll.u32 1, 14
    %s30 = sxor.u32 4294967295, %s29
    %s33 = sshll.u32 3, 24
    %s34 = sxor.u32 4294967295, %s33
    %s35 = sand.u32 0, %s34
    %s37 = sor.u32 %s35, 0
    %40 = sst [smem:[#allocation6]] 768
    %s41 = scalar_lea.smem [#allocation6], 1
    %42 = sst [smem:[%s41]] 16
    %s43 = scalar_lea.smem [#allocation6], 2
    %44 = sst [smem:[%s43]] 1
    %46 = dma.general %s25, 64, %s26, %s27, [#allocation5], [#allocation6], %s37, 0
    %s47 = smul.u32 4, 1
    %s48 = sshll.u32 %s47, 4
    %49 = dma.done [#allocation2], %s48
    %s50 = sshll.u32 %s47, 4
    %51 = dma.done %s27, %s50
    %s52 = scalar_lea.hbm %s0, 32
    %s53 = scalar_lea.hbm %s1, 128
    %s55 = sshll.u32 1, 14
    %s56 = sxor.u32 4294967295, %s55
    %s59 = sshll.u32 3, 24
    %s60 = sxor.u32 4294967295, %s59
    %s61 = sand.u32 0, %s60
    %s63 = sor.u32 %s61, 0
    %66 = sst [smem:[#allocation8]] 768
    %s67 = scalar_lea.smem [#allocation8], 1
    %68 = sst [smem:[%s67]] 16
    %s69 = scalar_lea.smem [#allocation8], 2
    %70 = sst [smem:[%s69]] 1
    %72 = dma.general %s52, 48, %s53, [#allocation2], [#allocation7], [#allocation8], %s63, 0
    %s73 = scalar_lea.hbm %s0, 48
    %s74 = scalar_lea.hbm %s1, 176
    %s76 = sshll.u32 1, 14
    %s77 = sxor.u32 4294967295, %s76
    %s80 = sshll.u32 3, 24
    %s81 = sxor.u32 4294967295, %s80
    %s82 = sand.u32 0, %s81
    %s84 = sor.u32 %s82, 0
    %87 = sst [smem:[#allocation10]] 768
    %s88 = scalar_lea.smem [#allocation10], 1
    %89 = sst [smem:[%s88]] 16
    %s90 = scalar_lea.smem [#allocation10], 2
    %91 = sst [smem:[%s90]] 1
    %93 = dma.general %s73, 48, %s74, %s27, [#allocation9], [#allocation10], %s84, 0
    %s94 = scalar_lea.hbm %s0, 64
    %s95 = scalar_lea.hbm %s1, 224
    %s96 = scalar_lea.sflag [#allocation2], 2
    %s98 = sshll.u32 1, 14
    %s99 = sxor.u32 4294967295, %s98
    %s102 = sshll.u32 3, 24
    %s103 = sxor.u32 4294967295, %s102
    %s104 = sand.u32 0, %s103
    %s106 = sor.u32 %s104, 0
    %109 = sst [smem:[#allocation12]] 768
    %s110 = scalar_lea.smem [#allocation12], 1
    %111 = sst [smem:[%s110]] 16
    %s112 = scalar_lea.smem [#allocation12], 2
    %113 = sst [smem:[%s112]] 1
    %115 = dma.general %s94, 48, %s95, %s96, [#allocation11], [#allocation12], %s106, 0
    %s116 = scalar_lea.hbm %s0, 80
    %s117 = scalar_lea.hbm %s1, 272
    %s118 = scalar_lea.sflag [#allocation2], 3
    %s120 = sshll.u32 1, 14
    %s121 = sxor.u32 4294967295, %s120
    %s124 = sshll.u32 3, 24
    %s125 = sxor.u32 4294967295, %s124
    %s126 = sand.u32 0, %s125
    %s128 = sor.u32 %s126, 0
    %131 = sst [smem:[#allocation14]] 768
    %s132 = scalar_lea.smem [#allocation14], 1
    %133 = sst [smem:[%s132]] 16
    %s134 = scalar_lea.smem [#allocation14], 2
    %135 = sst [smem:[%s134]] 1
    %137 = dma.general %s116, 48, %s117, %s118, [#allocation13], [#allocation14], %s128, 0
    %s138 = smul.u32 3, 1
    %s139 = sshll.u32 %s138, 4
    %140 = dma.done [#allocation2], %s139
    %s141 = sshll.u32 %s138, 4
    %142 = dma.done %s27, %s141
    %s143 = sshll.u32 %s138, 4
    %144 = dma.done %s96, %s143
    %s145 = sshll.u32 %s138, 4
    %146 = dma.done %s118, %s145
    loop: start=0, step=1, limit=32
    $region2: #{packer.1} parent=1 // loop_pre_header
      _
    $region3: #{packer.1} parent=1 // loop_header
      %s148 = sphi 0, %s152
      %p149 = scmp.ge.s32.totalorder %s148, 32
    $region4: #{packer.1} parent=1 // loop_header_branch
      %151 = sbr.rel (%p149) target = $region8
    $region5: #{packer.1} parent=1 // loop_body
      #allocation16 [shape = 'u32[3]{0}', space=smem, size = 0xc, scoped, tag = 'DMA stride descriptor']
      %s153 = sadd.s32 %s148, 6
      %s154 = smul.u32 %s148, 2
      %s155 = sadd.s32 %s154, 20
      %p156 = scmp.lt.s32.totalorder %s148, 0
      %s157 = ssub.s32 0, %s148
      %s158 = scalar_select %p156, %s157, %s148
      %s159 = sand.u32 %s158, 31
      %s160 = ssub.s32 0, %s159
      %s161 = scalar_select %p156, %s160, %s159
      %p162 = scmp.ne.s32.totalorder %s161, 0
      %p163 = scmp.lt.s32.totalorder %s161, 0
      %p164 = pnand %p163, %p162
      %p165 = pneg %p164
      %s166 = sadd.s32 %s161, 32
      %s167 = scalar_select %p165, %s166, %s161
      %s168 = smul.addr %s153, 16
      %s169 = scalar_lea.hbm %s0, %s168
      %s170 = smul.addr %s155, 16
      %s171 = scalar_lea.hbm %s1, %s170
      %s172 = scalar_lea.sflag [#allocation2], %s167
      %s174 = sshll.u32 1, 14
      %s175 = sxor.u32 4294967295, %s174
      %s178 = sshll.u32 3, 24
      %s179 = sxor.u32 4294967295, %s178
      %s180 = sand.u32 0, %s179
      %s182 = sor.u32 %s180, 0
      %185 = sst [smem:[#allocation16]] 768
      %s186 = scalar_lea.smem [#allocation16], 1
      %187 = sst [smem:[%s186]] 16
      %s188 = scalar_lea.smem [#allocation16], 2
      %189 = sst [smem:[%s188]] 1
      %191 = dma.general %s169, 32, %s171, %s172, [#allocation15], [#allocation16], %s182, 0
    $region6: #{packer.1} parent=1 // loop_footer
      %s152 = sadd.s32 1, %s148
    $region7: #{packer.1} parent=1 // loop_footer_branch
      %147 = sbr.rel target = $region3
    $region8: #{packer.1} parent=1 // loop_exit
      _
    loop: start=0, step=1, limit=6
    $region9: #{packer.1} parent=1 // loop_pre_header
      _
    $region10: #{packer.1} parent=1 // loop_header
      %s193 = sphi 0, %s197
      %p194 = scmp.ge.s32.totalorder %s193, 6
    $region11: #{packer.1} parent=1 // loop_header_branch
      %196 = sbr.rel (%p194) target = $region15
    $region12: #{packer.1} parent=1 // loop_body
      #allocation18 [shape = 'u32[3]{0}', space=smem, size = 0xc, scoped, tag = 'DMA stride descriptor']
      %s198 = sadd.s32 %s193, 32
      %p199 = scmp.lt.s32.totalorder %s193, 0
      %s200 = ssub.s32 0, %s193
      %s201 = scalar_select %p199, %s200, %s193
      %s202 = sand.u32 %s201, 31
      %s203 = ssub.s32 0, %s202
      %s204 = scalar_select %p199, %s203, %s202
      %p205 = scmp.ne.s32.totalorder %s204, 0
      %p206 = scmp.lt.s32.totalorder %s204, 0
      %p207 = pnand %p206, %p205
      %p208 = pneg %p207
      %s209 = sadd.s32 %s204, 32
      %s210 = scalar_select %p208, %s209, %s204
      %s211 = scalar_lea.sflag [#allocation2], %s210
      %s212 = smul.u32 2, 1
      %s213 = sshll.u32 %s212, 4
      %214 = dma.done %s211, %s213
      %s215 = sadd.s32 %s193, 38
      %s216 = smul.u32 %s198, 2
      %s217 = sadd.s32 %s216, 20
      %p218 = scmp.lt.s32.totalorder %s198, 0
      %s219 = ssub.s32 0, %s198
      %s220 = scalar_select %p218, %s219, %s198
      %s221 = sand.u32 %s220, 31
      %s222 = ssub.s32 0, %s221
      %s223 = scalar_select %p218, %s222, %s221
      %p224 = scmp.ne.s32.totalorder %s223, 0
      %p225 = scmp.lt.s32.totalorder %s223, 0
      %p226 = pnand %p225, %p224
      %p227 = pneg %p226
      %s228 = sadd.s32 %s223, 32
      %s229 = scalar_select %p227, %s228, %s223
      %s230 = smul.addr %s215, 16
      %s231 = scalar_lea.hbm %s0, %s230
      %s232 = smul.addr %s217, 16
      %s233 = scalar_lea.hbm %s1, %s232
      %s234 = scalar_lea.sflag [#allocation2], %s229
      %s236 = sshll.u32 1, 14
      %s237 = sxor.u32 4294967295, %s236
      %s240 = sshll.u32 3, 24
      %s241 = sxor.u32 4294967295, %s240
      %s242 = sand.u32 0, %s241
      %s244 = sor.u32 %s242, 0
      %247 = sst [smem:[#allocation18]] 768
      %s248 = scalar_lea.smem [#allocation18], 1
      %249 = sst [smem:[%s248]] 16
      %s250 = scalar_lea.smem [#allocation18], 2
      %251 = sst [smem:[%s250]] 1
      %253 = dma.general %s231, 32, %s233, %s234, [#allocation17], [#allocation18], %s244, 0
    $region13: #{packer.1} parent=1 // loop_footer
      %s197 = sadd.s32 1, %s193
    $region14: #{packer.1} parent=1 // loop_footer_branch
      %192 = sbr.rel target = $region10
    $region15: #{packer.1} parent=1 // loop_exit
      _
    loop: start=0, step=1, limit=32
    $region16: #{packer.1} parent=1 // loop_pre_header
      _
    $region17: #{packer.1} parent=1 // loop_header
      %s255 = sphi 0, %s259
      %p256 = scmp.ge.s32.totalorder %s255, 32
    $region18: #{packer.1} parent=1 // loop_header_branch
      %258 = sbr.rel (%p256) target = $region22
    $region19: #{packer.1} parent=1 // loop_body
      %s260 = sadd.s32 %s255, 6
      %p261 = scmp.lt.s32.totalorder %s260, 0
      %s262 = ssub.s32 0, %s260
      %s263 = scalar_select %p261, %s262, %s260
      %s264 = sand.u32 %s263, 31
      %s265 = ssub.s32 0, %s264
      %s266 = scalar_select %p261, %s265, %s264
      %p267 = scmp.ne.s32.totalorder %s266, 0
      %p268 = scmp.lt.s32.totalorder %s266, 0
      %p269 = pnand %p268, %p267
      %p270 = pneg %p269
      %s271 = sadd.s32 %s266, 32
      %s272 = scalar_select %p270, %s271, %s266
      %s273 = scalar_lea.sflag [#allocation2], %s272
      %s274 = smul.u32 2, 1
      %s275 = sshll.u32 %s274, 4
      %276 = dma.done %s273, %s275
    $region20: #{packer.1} parent=1 // loop_footer
      %s259 = sadd.s32 1, %s255
    $region21: #{packer.1} parent=1 // loop_footer_branch
      %254 = sbr.rel target = $region17
    $region22: #{packer.1} parent=1 // loop_exit
      _
    %s277 = scalar_lea.hbm %s0, 704
    %s278 = scalar_lea.hbm %s1, 1536
    %s280 = sshll.u32 1, 14
    %s281 = sxor.u32 4294967295, %s280
    %s284 = sshll.u32 3, 24
    %s285 = sxor.u32 4294967295, %s284
    %s286 = sand.u32 0, %s285
    %s288 = sor.u32 %s286, 0
    %291 = dma.general %s277, 64, %s278, [#allocation2], [#allocation19], [#allocation20], %s288, 0
    %s292 = sshll.u32 %s47, 4
    %293 = dma.done [#allocation2], %s292
  %294 = vsyncmov [#allocation2]
  %s295 = vpop.sfrf %294
  %p296 = scmp.eq.s32.totalorder %s295, 0
  %p297 = pneg %p296
  %299 = shalt.err (%p297)
  %s300 = scalar_lea.sflag [#allocation2], 1
  %301 = vsyncmov %s300
  %s302 = vpop.sfrf %301
  %p303 = scmp.eq.s32.totalorder %s302, 0
  %p304 = pneg %p303
  %306 = shalt.err (%p304)
  %s307 = scalar_lea.sflag [#allocation2], 2
  %308 = vsyncmov %s307
  %s309 = vpop.sfrf %308
  %p310 = scmp.eq.s32.totalorder %s309, 0
  %p311 = pneg %p310
  %313 = shalt.err (%p311)
  %s314 = scalar_lea.sflag [#allocation2], 3
  %315 = vsyncmov %s314
  %s316 = vpop.sfrf %315
  %p317 = scmp.eq.s32.totalorder %s316, 0
  %p318 = pneg %p317
  %320 = shalt.err (%p318)
  %s321 = scalar_lea.sflag [#allocation2], 4
  %322 = vsyncmov %s321
  %s323 = vpop.sfrf %322
  %p324 = scmp.eq.s32.totalorder %s323, 0
  %p325 = pneg %p324
  %327 = shalt.err (%p325)
  %s328 = scalar_lea.sflag [#allocation2], 5
  %329 = vsyncmov %s328
  %s330 = vpop.sfrf %329
  %p331 = scmp.eq.s32.totalorder %s330, 0
  %p332 = pneg %p331
  %334 = shalt.err (%p332)
  %s335 = scalar_lea.sflag [#allocation2], 6
  %336 = vsyncmov %s335
  %s337 = vpop.sfrf %336
  %p338 = scmp.eq.s32.totalorder %s337, 0
  %p339 = pneg %p338
  %341 = shalt.err (%p339)
  %s342 = scalar_lea.sflag [#allocation2], 7
  %343 = vsyncmov %s342
  %s344 = vpop.sfrf %343
  %p345 = scmp.eq.s32.totalorder %s344, 0
  %p346 = pneg %p345
  %348 = shalt.err (%p346)
  %s349 = scalar_lea.sflag [#allocation2], 8
  %350 = vsyncmov %s349
  %s351 = vpop.sfrf %350
  %p352 = scmp.eq.s32.totalorder %s351, 0
  %p353 = pneg %p352
  %355 = shalt.err (%p353)
  %s356 = scalar_lea.sflag [#allocation2], 9
  %357 = vsyncmov %s356
  %s358 = vpop.sfrf %357
  %p359 = scmp.eq.s32.totalorder %s358, 0
  %p360 = pneg %p359
  %362 = shalt.err (%p360)
  %s363 = scalar_lea.sflag [#allocation2], 10
  %364 = vsyncmov %s363
  %s365 = vpop.sfrf %364
  %p366 = scmp.eq.s32.totalorder %s365, 0
  %p367 = pneg %p366
  %369 = shalt.err (%p367)
  %s370 = scalar_lea.sflag [#allocation2], 11
  %371 = vsyncmov %s370
  %s372 = vpop.sfrf %371
  %p373 = scmp.eq.s32.totalorder %s372, 0
  %p374 = pneg %p373
  %376 = shalt.err (%p374)
  %s377 = scalar_lea.sflag [#allocation2], 12
  %378 = vsyncmov %s377
  %s379 = vpop.sfrf %378
  %p380 = scmp.eq.s32.totalorder %s379, 0
  %p381 = pneg %p380
  %383 = shalt.err (%p381)
  %s384 = scalar_lea.sflag [#allocation2], 13
  %385 = vsyncmov %s384
  %s386 = vpop.sfrf %385
  %p387 = scmp.eq.s32.totalorder %s386, 0
  %p388 = pneg %p387
  %390 = shalt.err (%p388)
  %s391 = scalar_lea.sflag [#allocation2], 14
  %392 = vsyncmov %s391
  %s393 = vpop.sfrf %392
  %p394 = scmp.eq.s32.totalorder %s393, 0
  %p395 = pneg %p394
  %397 = shalt.err (%p395)
  %s398 = scalar_lea.sflag [#allocation2], 15
  %399 = vsyncmov %s398
  %s400 = vpop.sfrf %399
  %p401 = scmp.eq.s32.totalorder %s400, 0
  %p402 = pneg %p401
  %404 = shalt.err (%p402)
  %s405 = scalar_lea.sflag [#allocation2], 16
  %406 = vsyncmov %s405
  %s407 = vpop.sfrf %406
  %p408 = scmp.eq.s32.totalorder %s407, 0
  %p409 = pneg %p408
  %411 = shalt.err (%p409)
  %s412 = scalar_lea.sflag [#allocation2], 17
  %413 = vsyncmov %s412
  %s414 = vpop.sfrf %413
  %p415 = scmp.eq.s32.totalorder %s414, 0
  %p416 = pneg %p415
  %418 = shalt.err (%p416)
  %s419 = scalar_lea.sflag [#allocation2], 18
  %420 = vsyncmov %s419
  %s421 = vpop.sfrf %420
  %p422 = scmp.eq.s32.totalorder %s421, 0
  %p423 = pneg %p422
  %425 = shalt.err (%p423)
  %s426 = scalar_lea.sflag [#allocation2], 19
  %427 = vsyncmov %s426
  %s428 = vpop.sfrf %427
  %p429 = scmp.eq.s32.totalorder %s428, 0
  %p430 = pneg %p429
  %432 = shalt.err (%p430)
  %s433 = scalar_lea.sflag [#allocation2], 20
  %434 = vsyncmov %s433
  %s435 = vpop.sfrf %434
  %p436 = scmp.eq.s32.totalorder %s435, 0
  %p437 = pneg %p436
  %439 = shalt.err (%p437)
  %s440 = scalar_lea.sflag [#allocation2], 21
  %441 = vsyncmov %s440
  %s442 = vpop.sfrf %441
  %p443 = scmp.eq.s32.totalorder %s442, 0
  %p444 = pneg %p443
  %446 = shalt.err (%p444)
  %s447 = scalar_lea.sflag [#allocation2], 22
  %448 = vsyncmov %s447
  %s449 = vpop.sfrf %448
  %p450 = scmp.eq.s32.totalorder %s449, 0
  %p451 = pneg %p450
  %453 = shalt.err (%p451)
  %s454 = scalar_lea.sflag [#allocation2], 23
  %455 = vsyncmov %s454
  %s456 = vpop.sfrf %455
  %p457 = scmp.eq.s32.totalorder %s456, 0
  %p458 = pneg %p457
  %460 = shalt.err (%p458)
  %s461 = scalar_lea.sflag [#allocation2], 24
  %462 = vsyncmov %s461
  %s463 = vpop.sfrf %462
  %p464 = scmp.eq.s32.totalorder %s463, 0
  %p465 = pneg %p464
  %467 = shalt.err (%p465)
  %s468 = scalar_lea.sflag [#allocation2], 25
  %469 = vsyncmov %s468
  %s470 = vpop.sfrf %469
  %p471 = scmp.eq.s32.totalorder %s470, 0
  %p472 = pneg %p471
  %474 = shalt.err (%p472)
  %s475 = scalar_lea.sflag [#allocation2], 26
  %476 = vsyncmov %s475
  %s477 = vpop.sfrf %476
  %p478 = scmp.eq.s32.totalorder %s477, 0
  %p479 = pneg %p478
  %481 = shalt.err (%p479)
  %s482 = scalar_lea.sflag [#allocation2], 27
  %483 = vsyncmov %s482
  %s484 = vpop.sfrf %483
  %p485 = scmp.eq.s32.totalorder %s484, 0
  %p486 = pneg %p485
  %488 = shalt.err (%p486)
  %s489 = scalar_lea.sflag [#allocation2], 28
  %490 = vsyncmov %s489
  %s491 = vpop.sfrf %490
  %p492 = scmp.eq.s32.totalorder %s491, 0
  %p493 = pneg %p492
  %495 = shalt.err (%p493)
  %s496 = scalar_lea.sflag [#allocation2], 29
  %497 = vsyncmov %s496
  %s498 = vpop.sfrf %497
  %p499 = scmp.eq.s32.totalorder %s498, 0
  %p500 = pneg %p499
  %502 = shalt.err (%p500)
  %s503 = scalar_lea.sflag [#allocation2], 30
  %504 = vsyncmov %s503
  %s505 = vpop.sfrf %504
  %p506 = scmp.eq.s32.totalorder %s505, 0
  %p507 = pneg %p506
  %509 = shalt.err (%p507)
  %s510 = scalar_lea.sflag [#allocation2], 31
  %511 = vsyncmov %s510
  %s512 = vpop.sfrf %511
  %p513 = scmp.eq.s32.totalorder %s512, 0
  %p514 = pneg %p513
  %516 = shalt.err (%p514)

// kernel: packer.1
$region0: #{packer.1}
  #allocation0 [shape = 'u32[]', space=smem, size = 0x4, offset = 0x4, fixed_abs, tag = 'smem constant byte address 0x4 - core index']
  #allocation1 [shape = 'u32[144,128]{1,0:T(1,128)}', space=vmem, size = 0x12000, scoped, tag = 'internal scratch']
  #allocation2 [shape = 's32[32]{0}', space=sflag, size = 0x80, scoped, tag = 'scratch operand']
  #allocation3 [shape = 's32[]', space=sflag, size = 0x4, offset = 0, fixed_abs, tag = 'sflag constant byte address 0x0 - dummy sync flag']
  #allocation4 [shape = 's32[]', space=sflag, size = 0x4, offset = 0, fixed_abs, tag = 'sflag constant byte address 0x0 - dummy sync flag']
  #allocation5 [shape = 's32[]', space=sflag, size = 0x4, offset = 0, fixed_abs, tag = 'sflag constant byte address 0x0 - dummy sync flag']
  #allocation6 [shape = 's32[]', space=sflag, size = 0x4, offset = 0, fixed_abs, tag = 'sflag constant byte address 0x0 - dummy sync flag']
  #allocation7 [shape = 's32[]', space=sflag, size = 0x4, offset = 0, fixed_abs, tag = 'sflag constant byte address 0x0 - dummy sync flag']
  #allocation8 [shape = 's32[]', space=sflag, size = 0x4, offset = 0, fixed_abs, tag = 'sflag constant byte address 0x0 - dummy sync flag']
  #allocation9 [shape = 's32[]', space=sflag, size = 0x4, offset = 0, fixed_abs, tag = 'sflag constant byte address 0x0 - dummy sync flag']
  #allocation10 [shape = 's32[]', space=sflag, size = 0x4, offset = 0, fixed_abs, tag = 'sflag constant byte address 0x0 - dummy sync flag']
  #allocation11 [shape = 's32[]', space=sflag, size = 0x4, offset = 0, fixed_abs, tag = 'sflag constant byte address 0x0 - dummy sync flag']
  #allocation12 [shape = 's32[]', space=sflag, size = 0x4, offset = 0, fixed_abs, tag = 'sflag constant byte address 0x0 - dummy sync flag']
  #allocation13 [shape = 'u32[]', space=smem, size = 0x4, offset = 0x44, fixed_abs, tag = 'smem constant byte address 0x44 - assertion arg 0']
  #allocation14 [shape = 'u32[]', space=smem, size = 0x4, offset = 0x48, fixed_abs, tag = 'smem constant byte address 0x48 - assertion arg 1']
  #allocation15 [shape = 's32[]', space=sflag, size = 0x4, offset = 0, fixed_abs, tag = 'sflag constant byte address 0x0 - dummy sync flag']
  #allocation16 [shape = 's32[]', space=sflag, size = 0x4, offset = 0, fixed_abs, tag = 'sflag constant byte address 0x0 - dummy sync flag']
  #allocation17 [shape = 's32[]', space=sflag, size = 0x4, offset = 0, fixed_abs, tag = 'sflag constant byte address 0x0 - dummy sync flag']
  #allocation18 [shape = 's32[]', space=sflag, size = 0x4, offset = 0, fixed_abs, tag = 'sflag constant byte address 0x0 - dummy sync flag']
  #allocation19 [shape = 's32[]', space=sflag, size = 0x4, offset = 0, fixed_abs, tag = 'sflag constant byte address 0x0 - dummy sync flag']
  #allocation20 [shape = 's32[]', space=sflag, size = 0x4, offset = 0, fixed_abs, tag = 'sflag constant byte address 0x0 - dummy sync flag']
  %s0 = inlined_call_operand.hbm [shape: f32[4,48,128], index: 0, kind: input, shape index: {}]
  %s1 = inlined_call_operand.vmem [shape: f32[100,1,128], index: 1, kind: output, shape index: {}]
  %s2 = sld [smem:[#allocation0]]
  $region39: #{packer.1} parent=0
    _
  %s4 = ssub.s32 1, %s2
  %s5 = scalar_select 0, %s4, %s2
  %s7 = sshll.u32 %s1, 4
  %s8 = int_to_ptr.vmem [resolvable:$true] %s7
  %10 = dma.hbm_to_vmem [thread:$0]  %s0, 64, %s8, [#allocation2], 768, 16, 1
  %s11 = scalar_lea.hbm %s0, 16
  %s12 = scalar_lea.vmem %s1, 4
  %s13 = scalar_lea.sflag [#allocation2], 1
  %s15 = sshll.u32 %s12, 4
  %s16 = int_to_ptr.vmem [resolvable:$true] %s15
  %18 = dma.hbm_to_vmem [thread:$0]  %s11, 64, %s16, %s13, 768, 16, 1
  %s19 = smul.u32 4, 1
  %s20 = smul.u32 %s19, 1
  %s21 = sshll.u32 %s20, 4
  %22 = dma.done [#allocation2], %s21
  %s23 = sshll.u32 %s20, 4
  %24 = dma.done %s13, %s23
  %s25 = scalar_lea.hbm %s0, 32
  %s26 = scalar_lea.vmem %s1, 8
  %s28 = sshll.u32 %s26, 4
  %s29 = int_to_ptr.vmem [resolvable:$true] %s28
  %31 = dma.hbm_to_vmem [thread:$0]  %s25, 48, %s29, [#allocation2], 768, 16, 1
  %s32 = scalar_lea.hbm %s0, 48
  %s33 = scalar_lea.vmem %s1, 11
  %s35 = sshll.u32 %s33, 4
  %s36 = int_to_ptr.vmem [resolvable:$true] %s35
  %38 = dma.hbm_to_vmem [thread:$0]  %s32, 48, %s36, %s13, 768, 16, 1
  %s39 = scalar_lea.hbm %s0, 64
  %s40 = scalar_lea.vmem %s1, 14
  %s41 = scalar_lea.sflag [#allocation2], 2
  %s43 = sshll.u32 %s40, 4
  %s44 = int_to_ptr.vmem [resolvable:$true] %s43
  %46 = dma.hbm_to_vmem [thread:$0]  %s39, 48, %s44, %s41, 768, 16, 1
  %s47 = scalar_lea.hbm %s0, 80
  %s48 = scalar_lea.vmem %s1, 17
  %s49 = scalar_lea.sflag [#allocation2], 3
  %s51 = sshll.u32 %s48, 4
  %s52 = int_to_ptr.vmem [resolvable:$true] %s51
  %54 = dma.hbm_to_vmem [thread:$0]  %s47, 48, %s52, %s49, 768, 16, 1
  %s55 = smul.u32 3, 1
  %s56 = smul.u32 %s55, 1
  %s57 = sshll.u32 %s56, 4
  %58 = dma.done [#allocation2], %s57
  %s59 = sshll.u32 %s56, 4
  %60 = dma.done %s13, %s59
  %s61 = sshll.u32 %s56, 4
  %62 = dma.done %s41, %s61
  %s63 = sshll.u32 %s56, 4
  %64 = dma.done %s49, %s63
  loop: start=0, step=1, limit=32
  $region2: #{packer.1} parent=0 // loop_pre_header
    _
  $region3: #{packer.1} parent=0 // loop_header
    %s66 = sphi 0, %s70
    %p67 = scmp.ge.s32.totalorder %s66, 32
  $region4: #{packer.1} parent=0 // loop_header_branch
    %69 = sbr.rel (%p67) target = $region8
  $region5: #{packer.1} parent=0 // loop_body
    %s71 = sadd.s32 %s66, 6
    %s72 = smul.u32 %s66, 2
    %s73 = sadd.s32 %s72, 20
    %p74 = scmp.lt.s32.totalorder %s66, 0
    %s75 = ssub.s32 0, %s66
    %s76 = scalar_select %p74, %s75, %s66
    %s77 = sand.u32 %s76, 31
    %s78 = ssub.s32 0, %s77
    %s79 = scalar_select %p74, %s78, %s77
    %p80 = scmp.ne.s32.totalorder %s79, 0
    %p81 = scmp.lt.s32.totalorder %s79, 0
    %p82 = pnand %p81, %p80
    %p83 = pneg %p82
    %s84 = sadd.s32 %s79, 32
    %s85 = scalar_select %p83, %s84, %s79
    %s86 = smul.addr %s71, 16
    %s87 = scalar_lea.hbm %s0, %s86
    %s88 = scalar_lea.vmem %s1, %s73
    %s89 = scalar_lea.sflag [#allocation2], %s85
    %s91 = sshll.u32 %s88, 4
    %s92 = int_to_ptr.vmem [resolvable:$true] %s91
    %94 = dma.hbm_to_vmem [thread:$0]  %s87, 32, %s92, %s89, 768, 16, 1
  $region6: #{packer.1} parent=0 // loop_footer
    %s70 = sadd.s32 1, %s66
  $region7: #{packer.1} parent=0 // loop_footer_branch
    %65 = sbr.rel target = $region3
  $region8: #{packer.1} parent=0 // loop_exit
    _
  loop: start=0, step=1, limit=6
  $region9: #{packer.1} parent=0 // loop_pre_header
    _
  $region10: #{packer.1} parent=0 // loop_header
    %s96 = sphi 0, %s100
    %p97 = scmp.ge.s32.totalorder %s96, 6
  $region11: #{packer.1} parent=0 // loop_header_branch
    %99 = sbr.rel (%p97) target = $region15
  $region12: #{packer.1} parent=0 // loop_body
    %s101 = sadd.s32 %s96, 32
    %p102 = scmp.lt.s32.totalorder %s96, 0
    %s103 = ssub.s32 0, %s96
    %s104 = scalar_select %p102, %s103, %s96
    %s105 = sand.u32 %s104, 31
    %s106 = ssub.s32 0, %s105
    %s107 = scalar_select %p102, %s106, %s105
    %p108 = scmp.ne.s32.totalorder %s107, 0
    %p109 = scmp.lt.s32.totalorder %s107, 0
    %p110 = pnand %p109, %p108
    %p111 = pneg %p110
    %s112 = sadd.s32 %s107, 32
    %s113 = scalar_select %p111, %s112, %s107
    %s114 = scalar_lea.sflag [#allocation2], %s113
    %s115 = smul.u32 2, 1
    %s116 = smul.u32 %s115, 1
    %s117 = sshll.u32 %s116, 4
    %118 = dma.done %s114, %s117
    %s119 = sadd.s32 %s96, 38
    %s120 = smul.u32 %s101, 2
    %s121 = sadd.s32 %s120, 20
    %p122 = scmp.lt.s32.totalorder %s101, 0
    %s123 = ssub.s32 0, %s101
    %s124 = scalar_select %p122, %s123, %s101
    %s125 = sand.u32 %s124, 31
    %s126 = ssub.s32 0, %s125
    %s127 = scalar_select %p122, %s126, %s125
    %p128 = scmp.ne.s32.totalorder %s127, 0
    %p129 = scmp.lt.s32.totalorder %s127, 0
    %p130 = pnand %p129, %p128
    %p131 = pneg %p130
    %s132 = sadd.s32 %s127, 32
    %s133 = scalar_select %p131, %s132, %s127
    %s134 = smul.addr %s119, 16
    %s135 = scalar_lea.hbm %s0, %s134
    %s136 = scalar_lea.vmem %s1, %s121
    %s137 = scalar_lea.sflag [#allocation2], %s133
    %s139 = sshll.u32 %s136, 4
    %s140 = int_to_ptr.vmem [resolvable:$true] %s139
    %142 = dma.hbm_to_vmem [thread:$0]  %s135, 32, %s140, %s137, 768, 16, 1
  $region13: #{packer.1} parent=0 // loop_footer
    %s100 = sadd.s32 1, %s96
  $region14: #{packer.1} parent=0 // loop_footer_branch
    %95 = sbr.rel target = $region10
  $region15: #{packer.1} parent=0 // loop_exit
    _
  loop: start=0, step=1, limit=32
  $region16: #{packer.1} parent=0 // loop_pre_header
    _
  $region17: #{packer.1} parent=0 // loop_header
    %s144 = sphi 0, %s148
    %p145 = scmp.ge.s32.totalorder %s144, 32
  $region18: #{packer.1} parent=0 // loop_header_branch
    %147 = sbr.rel (%p145) target = $region22
  $region19: #{packer.1} parent=0 // loop_body
    %s149 = sadd.s32 %s144, 6
    %p150 = scmp.lt.s32.totalorder %s149, 0
    %s151 = ssub.s32 0, %s149
    %s152 = scalar_select %p150, %s151, %s149
    %s153 = sand.u32 %s152, 31
    %s154 = ssub.s32 0, %s153
    %s155 = scalar_select %p150, %s154, %s153
    %p156 = scmp.ne.s32.totalorder %s155, 0
    %p157 = scmp.lt.s32.totalorder %s155, 0
    %p158 = pnand %p157, %p156
    %p159 = pneg %p158
    %s160 = sadd.s32 %s155, 32
    %s161 = scalar_select %p159, %s160, %s155
    %s162 = scalar_lea.sflag [#allocation2], %s161
    %s163 = smul.u32 2, 1
    %s164 = smul.u32 %s163, 1
    %s165 = sshll.u32 %s164, 4
    %166 = dma.done %s162, %s165
  $region20: #{packer.1} parent=0 // loop_footer
    %s148 = sadd.s32 1, %s144
  $region21: #{packer.1} parent=0 // loop_footer_branch
    %143 = sbr.rel target = $region17
  $region22: #{packer.1} parent=0 // loop_exit
    _
  %s167 = scalar_lea.hbm %s0, 704
  %s168 = scalar_lea.vmem %s1, 96
  // Predicated region
  $region23: #{packer.1} parent=0 // pred_check
    _
  $region24: #{packer.1} parent=0 // pred_check_branch
    %170 = sbr.rel target = $region26
  $region25: #{packer.1} parent=0 // pred_region
    %171 = sst [smem:[#allocation13]] [#allocation12]
    %172 = sst [smem:[#allocation14]] [#allocation11]
  $region26: #{packer.1} parent=0 // pred_fallthru
    _
  %174 = shalt.err (0)
  %s176 = sshll.u32 %s168, 4
  %s177 = int_to_ptr.vmem [resolvable:$true] %s176
  %179 = dma.hbm_to_vmem [thread:$0]  %s167, 16, %s177, [#allocation2]
  %s180 = scalar_lea.hbm %s0, 720
  %s181 = scalar_lea.vmem %s1, 97
  // Predicated region
  $region27: #{packer.1} parent=0 // pred_check
    _
  $region28: #{packer.1} parent=0 // pred_check_branch
    %183 = sbr.rel target = $region30
  $region29: #{packer.1} parent=0 // pred_region
    %184 = sst [smem:[#allocation13]] [#allocation16]
    %185 = sst [smem:[#allocation14]] [#allocation15]
  $region30: #{packer.1} parent=0 // pred_fallthru
    _
  %187 = shalt.err (0)
  %s189 = sshll.u32 %s181, 4
  %s190 = int_to_ptr.vmem [resolvable:$true] %s189
  %192 = dma.hbm_to_vmem [thread:$0]  %s180, 16, %s190, %s13
  %s193 = scalar_lea.hbm %s0, 736
  %s194 = scalar_lea.vmem %s1, 98
  // Predicated region
  $region31: #{packer.1} parent=0 // pred_check
    _
  $region32: #{packer.1} parent=0 // pred_check_branch
    %196 = sbr.rel target = $region34
  $region33: #{packer.1} parent=0 // pred_region
    %197 = sst [smem:[#allocation13]] [#allocation18]
    %198 = sst [smem:[#allocation14]] [#allocation17]
  $region34: #{packer.1} parent=0 // pred_fallthru
    _
  %200 = shalt.err (0)
  %s202 = sshll.u32 %s194, 4
  %s203 = int_to_ptr.vmem [resolvable:$true] %s202
  %205 = dma.hbm_to_vmem [thread:$0]  %s193, 16, %s203, %s41
  %s206 = scalar_lea.hbm %s0, 752
  %s207 = scalar_lea.vmem %s1, 99
  // Predicated region
  $region35: #{packer.1} parent=0 // pred_check
    _
  $region36: #{packer.1} parent=0 // pred_check_branch
    %209 = sbr.rel target = $region38
  $region37: #{packer.1} parent=0 // pred_region
    %210 = sst [smem:[#allocation13]] [#allocation20]
    %211 = sst [smem:[#allocation14]] [#allocation19]
  $region38: #{packer.1} parent=0 // pred_fallthru
    _
  %213 = shalt.err (0)
  %s215 = sshll.u32 %s207, 4
  %s216 = int_to_ptr.vmem [resolvable:$true] %s215
  %218 = dma.hbm_to_vmem [thread:$0]  %s206, 16, %s216, %s49
  %s219 = smul.u32 1, 1
  %s220 = smul.u32 %s219, 1
  %s221 = sshll.u32 %s220, 4
  %222 = dma.done [#allocation2], %s221
  %s223 = sshll.u32 %s220, 4
  %224 = dma.done %s13, %s223
  %s225 = sshll.u32 %s220, 4
  %226 = dma.done %s41, %s225
  %s227 = sshll.u32 %s220, 4
  %228 = dma.done %s49, %s227
  %229 = vsyncmov [#allocation2]
  %s230 = vpop.sfrf %229
  %p231 = scmp.eq.s32.totalorder %s230, 0
  %p232 = pneg %p231
  %234 = shalt.err (%p232)
  %s235 = scalar_lea.sflag [#allocation2], 1
  %236 = vsyncmov %s235
  %s237 = vpop.sfrf %236
  %p238 = scmp.eq.s32.totalorder %s237, 0
  %p239 = pneg %p238
  %241 = shalt.err (%p239)
  %s242 = scalar_lea.sflag [#allocation2], 2
  %243 = vsyncmov %s242
  %s244 = vpop.sfrf %243
  %p245 = scmp.eq.s32.totalorder %s244, 0
  %p246 = pneg %p245
  %248 = shalt.err (%p246)
  %s249 = scalar_lea.sflag [#allocation2], 3
  %250 = vsyncmov %s249
  %s251 = vpop.sfrf %250
  %p252 = scmp.eq.s32.totalorder %s251, 0
  %p253 = pneg %p252
  %255 = shalt.err (%p253)
  %s256 = scalar_lea.sflag [#allocation2], 4
  %257 = vsyncmov %s256
  %s258 = vpop.sfrf %257
  %p259 = scmp.eq.s32.totalorder %s258, 0
  %p260 = pneg %p259
  %262 = shalt.err (%p260)
  %s263 = scalar_lea.sflag [#allocation2], 5
  %264 = vsyncmov %s263
  %s265 = vpop.sfrf %264
  %p266 = scmp.eq.s32.totalorder %s265, 0
  %p267 = pneg %p266
  %269 = shalt.err (%p267)
  %s270 = scalar_lea.sflag [#allocation2], 6
  %271 = vsyncmov %s270
  %s272 = vpop.sfrf %271
  %p273 = scmp.eq.s32.totalorder %s272, 0
  %p274 = pneg %p273
  %276 = shalt.err (%p274)
  %s277 = scalar_lea.sflag [#allocation2], 7
  %278 = vsyncmov %s277
  %s279 = vpop.sfrf %278
  %p280 = scmp.eq.s32.totalorder %s279, 0
  %p281 = pneg %p280
  %283 = shalt.err (%p281)
  %s284 = scalar_lea.sflag [#allocation2], 8
  %285 = vsyncmov %s284
  %s286 = vpop.sfrf %285
  %p287 = scmp.eq.s32.totalorder %s286, 0
  %p288 = pneg %p287
  %290 = shalt.err (%p288)
  %s291 = scalar_lea.sflag [#allocation2], 9
  %292 = vsyncmov %s291
  %s293 = vpop.sfrf %292
  %p294 = scmp.eq.s32.totalorder %s293, 0
  %p295 = pneg %p294
  %297 = shalt.err (%p295)
  %s298 = scalar_lea.sflag [#allocation2], 10
  %299 = vsyncmov %s298
  %s300 = vpop.sfrf %299
  %p301 = scmp.eq.s32.totalorder %s300, 0
  %p302 = pneg %p301
  %304 = shalt.err (%p302)
  %s305 = scalar_lea.sflag [#allocation2], 11
  %306 = vsyncmov %s305
  %s307 = vpop.sfrf %306
  %p308 = scmp.eq.s32.totalorder %s307, 0
  %p309 = pneg %p308
  %311 = shalt.err (%p309)
  %s312 = scalar_lea.sflag [#allocation2], 12
  %313 = vsyncmov %s312
  %s314 = vpop.sfrf %313
  %p315 = scmp.eq.s32.totalorder %s314, 0
  %p316 = pneg %p315
  %318 = shalt.err (%p316)
  %s319 = scalar_lea.sflag [#allocation2], 13
  %320 = vsyncmov %s319
  %s321 = vpop.sfrf %320
  %p322 = scmp.eq.s32.totalorder %s321, 0
  %p323 = pneg %p322
  %325 = shalt.err (%p323)
  %s326 = scalar_lea.sflag [#allocation2], 14
  %327 = vsyncmov %s326
  %s328 = vpop.sfrf %327
  %p329 = scmp.eq.s32.totalorder %s328, 0
  %p330 = pneg %p329
  %332 = shalt.err (%p330)
  %s333 = scalar_lea.sflag [#allocation2], 15
  %334 = vsyncmov %s333
  %s335 = vpop.sfrf %334
  %p336 = scmp.eq.s32.totalorder %s335, 0
  %p337 = pneg %p336
  %339 = shalt.err (%p337)
  %s340 = scalar_lea.sflag [#allocation2], 16
  %341 = vsyncmov %s340
  %s342 = vpop.sfrf %341
  %p343 = scmp.eq.s32.totalorder %s342, 0
  %p344 = pneg %p343
  %346 = shalt.err (%p344)
  %s347 = scalar_lea.sflag [#allocation2], 17
  %348 = vsyncmov %s347
  %s349 = vpop.sfrf %348
  %p350 = scmp.eq.s32.totalorder %s349, 0
  %p351 = pneg %p350
  %353 = shalt.err (%p351)
  %s354 = scalar_lea.sflag [#allocation2], 18
  %355 = vsyncmov %s354
  %s356 = vpop.sfrf %355
  %p357 = scmp.eq.s32.totalorder %s356, 0
  %p358 = pneg %p357
  %360 = shalt.err (%p358)
  %s361 = scalar_lea.sflag [#allocation2], 19
  %362 = vsyncmov %s361
  %s363 = vpop.sfrf %362
  %p364 = scmp.eq.s32.totalorder %s363, 0
  %p365 = pneg %p364
  %367 = shalt.err (%p365)
  %s368 = scalar_lea.sflag [#allocation2], 20
  %369 = vsyncmov %s368
  %s370 = vpop.sfrf %369
  %p371 = scmp.eq.s32.totalorder %s370, 0
  %p372 = pneg %p371
  %374 = shalt.err (%p372)
  %s375 = scalar_lea.sflag [#allocation2], 21
  %376 = vsyncmov %s375
  %s377 = vpop.sfrf %376
  %p378 = scmp.eq.s32.totalorder %s377, 0
  %p379 = pneg %p378
  %381 = shalt.err (%p379)
  %s382 = scalar_lea.sflag [#allocation2], 22
  %383 = vsyncmov %s382
  %s384 = vpop.sfrf %383
  %p385 = scmp.eq.s32.totalorder %s384, 0
  %p386 = pneg %p385
  %388 = shalt.err (%p386)
  %s389 = scalar_lea.sflag [#allocation2], 23
  %390 = vsyncmov %s389
  %s391 = vpop.sfrf %390
  %p392 = scmp.eq.s32.totalorder %s391, 0
  %p393 = pneg %p392
  %395 = shalt.err (%p393)
  %s396 = scalar_lea.sflag [#allocation2], 24
  %397 = vsyncmov %s396
  %s398 = vpop.sfrf %397
  %p399 = scmp.eq.s32.totalorder %s398, 0
  %p400 = pneg %p399
  %402 = shalt.err (%p400)
  %s403 = scalar_lea.sflag [#allocation2], 25
  %404 = vsyncmov %s403
  %s405 = vpop.sfrf %404
  %p406 = scmp.eq.s32.totalorder %s405, 0
  %p407 = pneg %p406
  %409 = shalt.err (%p407)
  %s410 = scalar_lea.sflag [#allocation2], 26
  %411 = vsyncmov %s410
  %s412 = vpop.sfrf %411
  %p413 = scmp.eq.s32.totalorder %s412, 0
  %p414 = pneg %p413
  %416 = shalt.err (%p414)
  %s417 = scalar_lea.sflag [#allocation2], 27
  %418 = vsyncmov %s417
  %s419 = vpop.sfrf %418
  %p420 = scmp.eq.s32.totalorder %s419, 0
  %p421 = pneg %p420
  %423 = shalt.err (%p421)
  %s424 = scalar_lea.sflag [#allocation2], 28
  %425 = vsyncmov %s424
  %s426 = vpop.sfrf %425
  %p427 = scmp.eq.s32.totalorder %s426, 0
  %p428 = pneg %p427
  %430 = shalt.err (%p428)
  %s431 = scalar_lea.sflag [#allocation2], 29
  %432 = vsyncmov %s431
  %s433 = vpop.sfrf %432
  %p434 = scmp.eq.s32.totalorder %s433, 0
  %p435 = pneg %p434
  %437 = shalt.err (%p435)
  %s438 = scalar_lea.sflag [#allocation2], 30
  %439 = vsyncmov %s438
  %s440 = vpop.sfrf %439
  %p441 = scmp.eq.s32.totalorder %s440, 0
  %p442 = pneg %p441
  %444 = shalt.err (%p442)
  %s445 = scalar_lea.sflag [#allocation2], 31
  %446 = vsyncmov %s445
  %s447 = vpop.sfrf %446
  %p448 = scmp.eq.s32.totalorder %s447, 0
  %p449 = pneg %p448
  %451 = shalt.err (%p449)

</llo_original>
